<compile_context>
chip_gen: v6e
topology: v6e:2x2x1
jax: 0.10.0
libtpu: 0.0.40
codegen_flags: <defaults>
</compile_context>

<pallas_src>
import jax
import jax.numpy as jnp
from jax import lax
from jax.experimental import pallas as pl
from jax.experimental.pallas import tpu as pltpu

# ---------------- model sizes (small, consistent with the module) ----------------
SRC_LEN = 7
TRG_LEN = 8
BATCH = 2
SRC_VOCAB = 16
TRG_VOCAB = 20
EMB_DIM = 32
ENC_HID = 32
DEC_HID = 32


# ---------------- shared GRU cell (PyTorch gate order: r, z, n) ----------------
def _gru_cell(x_bf, h, wih_bf, whh_bf, bih, bhh, hid):
    """bf16 matmul operands -> f32 accum; element-wise gate math and state stay f32."""
    gi = jnp.dot(x_bf, wih_bf, preferred_element_type=jnp.float32) + bih
    gh = jnp.dot(h.astype(jnp.bfloat16), whh_bf, preferred_element_type=jnp.float32) + bhh
    r = jax.nn.sigmoid(gi[:, :hid] + gh[:, :hid])
    z = jax.nn.sigmoid(gi[:, hid:2 * hid] + gh[:, hid:2 * hid])
    n = jnp.tanh(gi[:, 2 * hid:] + r * gh[:, 2 * hid:])
    return (1.0 - z) * n + z * h


# ---------------- encoder kernel: interleaved bidirectional GRU + hidden combine + enc_proj ------
def encoder_kernel(emb_ref,
                   wih_f_ref, whh_f_ref, bih_f_ref, bhh_f_ref,
                   wih_b_ref, whh_b_ref, bih_b_ref, bhh_b_ref,
                   fc_wf_ref, fc_wb_ref, fc_b_ref,
                   aw_f_ref, aw_b_ref, attn_b_ref,
                   enc_ref, encp_ref, hidden_ref,
                   fwd_sc, bwd_sc):
    S, B, _ = emb_ref.shape
    H = whh_f_ref.shape[0]

    wih_f = wih_f_ref[...]; whh_f = whh_f_ref[...]
    bih_f = bih_f_ref[...]; bhh_f = bhh_f_ref[...]
    wih_b = wih_b_ref[...]; whh_b = whh_b_ref[...]
    bih_b = bih_b_ref[...]; bhh_b = bhh_b_ref[...]

    def body(t, carry):
        h_f, h_b = carry
        x_f = emb_ref[t].astype(jnp.bfloat16)           # (B, E)
        x_b = emb_ref[S - 1 - t].astype(jnp.bfloat16)
        h_f = _gru_cell(x_f, h_f, wih_f, whh_f, bih_f, bhh_f, H)
        h_b = _gru_cell(x_b, h_b, wih_b, whh_b, bih_b, bhh_b, H)
        fwd_sc[t] = h_f                                  # accumulate in VMEM scratch
        bwd_sc[S - 1 - t] = h_b
        return h_f, h_b

    h0 = jnp.zeros((B, H), jnp.float32)
    h_f, h_b = lax.fori_loop(0, S, body, (h0, h0))

    # hidden = tanh(fc(cat(h_fwd_last, h_bwd_last))) -- concat replaced by split-weight sum
    hidden_ref[...] = jnp.tanh(
        jnp.dot(h_f.astype(jnp.bfloat16), fc_wf_ref[...], preferred_element_type=jnp.float32)
        + jnp.dot(h_b.astype(jnp.bfloat16), fc_wb_ref[...], preferred_element_type=jnp.float32)
        + fc_b_ref[...])

    # single lane-dense (S, B, 2H) encoder output: fwd half | bwd half (bulk stores, done once)
    fwd_all = fwd_sc[...]                                # (S, B, H)
    bwd_all = bwd_sc[...]
    enc_ref[:, :, 0:H] = fwd_all
    enc_ref[:, :, H:2 * H] = bwd_all

    # encoder-side attention projection, hoisted out of the decode loop (loop-invariant):
    # enc_proj = enc @ W_enc + attn_b  (split into fwd/bwd halves -> no concat)
    flat_f = fwd_all.reshape(S * B, H).astype(jnp.bfloat16)
    flat_b = bwd_all.reshape(S * B, H).astype(jnp.bfloat16)
    proj = (jnp.dot(flat_f, aw_f_ref[...], preferred_element_type=jnp.float32)
            + jnp.dot(flat_b, aw_b_ref[...], preferred_element_type=jnp.float32)
            + attn_b_ref[...])
    encp_ref[...] = proj.reshape(S, B, -1)               # (S, B, DEC_HID)


# ---------------- fused decoder kernel: all decode steps in one launch ----------------
def decoder_kernel(tf_ref, trg_emb_ref, emb_tbl_ref, h0_ref, enc_ref, encp_ref,
                   wh_ref, v_ref,
                   wih_e_ref, wih_w_ref, whh_ref, bih_ref, bhh_ref,
                   fco_h_ref, fco_w_ref, fco_e_ref, fco_b_ref,
                   out_ref):
    S, B, F = enc_ref.shape                              # F = 2 * ENC_HID
    T, _, V = out_ref.shape
    Hd = h0_ref.shape[-1]
    Vt = emb_tbl_ref.shape[0]

    # hoist all loop-invariant loads out of the decode loop (DMA'd once for the whole loop)
    enc = enc_ref[...]                                   # (S, B, F) f32
    encp = encp_ref[...]                                 # (S, B, Hd) f32
    wh = wh_ref[...]
    v = v_ref[...]
    emb_tbl = emb_tbl_ref[...]                           # (Vt, E) bf16
    wih_e = wih_e_ref[...]; wih_w = wih_w_ref[...]; whh = whh_ref[...]
    bih = bih_ref[...]; bhh = bhh_ref[...]
    fco_h = fco_h_ref[...]; fco_w = fco_w_ref[...]; fco_e = fco_e_ref[...]
    fco_b = fco_b_ref[...]

    out_ref[0] = jnp.zeros((B, V), jnp.float32)          # outputs[0] stays zero, as in PyTorch

    def step(t, carry):
        emb, h = carry                                   # (B, E) f32, (B, Hd) f32
        emb_bf = emb.astype(jnp.bfloat16)
        h_bf = h.astype(jnp.bfloat16)

        # ---- attention: energy = tanh(enc_proj + h @ W_h); a = softmax_S(v . energy) ----
        hproj = jnp.dot(h_bf, wh, preferred_element_type=jnp.float32)       # (B, Hd)
        energy = jnp.tanh(encp + hproj[None, :, :])                         # (S, B, Hd)
        scores = jnp.sum(energy * v, axis=-1, keepdims=True)                # (S, B, 1)
        m = jnp.max(scores, axis=0, keepdims=True)
        e = jnp.exp(scores - m)
        l = jnp.sum(e, axis=0, keepdims=True)
        a = e * pl.reciprocal(l, approx=True)                               # softmax over src axis
        weighted = jnp.sum(a * enc, axis=0)                                 # (B, F) == bmm(a, enc)
        w_bf = weighted.astype(jnp.bfloat16)

        # ---- GRU cell on cat(embedded, weighted): concat replaced by split-weight sum ----
        gi = (jnp.dot(emb_bf, wih_e, preferred_element_type=jnp.float32)
              + jnp.dot(w_bf, wih_w, preferred_element_type=jnp.float32) + bih)
        gh = jnp.dot(h_bf, whh, preferred_element_type=jnp.float32) + bhh
        r = jax.nn.sigmoid(gi[:, :Hd] + gh[:, :Hd])
        z = jax.nn.sigmoid(gi[:, Hd:2 * Hd] + gh[:, Hd:2 * Hd])
        n = jnp.tanh(gi[:, 2 * Hd:] + r * gh[:, 2 * Hd:])
        h_new = (1.0 - z) * n + z * h

        # ---- prediction = fc_out(cat(output, weighted, embedded)): split-weight sum ----
        pred = (jnp.dot(h_new.astype(jnp.bfloat16), fco_h, preferred_element_type=jnp.float32)
                + jnp.dot(w_bf, fco_w, preferred_element_type=jnp.float32)
                + jnp.dot(emb_bf, fco_e, preferred_element_type=jnp.float32)
                + fco_b)                                                    # (B, V)
        out_ref[t] = pred

        # ---- next input: teacher forcing vs greedy (in-kernel argmax + one-hot gather) ----
        col = lax.broadcasted_iota(jnp.int32, (B, V), 1)
        mx = jnp.max(pred, axis=-1, keepdims=True)
        top1 = jnp.min(jnp.where(pred == mx, col, V), axis=-1, keepdims=True)   # (B, 1) int32
        onehot = (lax.broadcasted_iota(jnp.int32, (B, Vt), 1) == top1).astype(jnp.bfloat16)
        gen_emb = jnp.dot(onehot, emb_tbl, preferred_element_type=jnp.float32)  # (B, E)
        teach_emb = trg_emb_ref[t]                                              # (B, E)
        next_emb = jnp.where(tf_ref[t] == 1, teach_emb, gen_emb)
        return next_emb, h_new

    _ = lax.fori_loop(1, T, step, (trg_emb_ref[0], h0_ref[...]))


# ---------------- wrappers ----------------
def _vmem_spec():
    return pl.BlockSpec(memory_space=pltpu.MemorySpace.VMEM)


@jax.jit
def _forward(src, trg, tf_flags, params):
    H, Hd, E = ENC_HID, DEC_HID, EMB_DIM
    assert params["enc_fc_w"].shape == (2 * H, Hd)       # encoder hidden combine -> decoder hidden
    assert params["dec_whh"].shape[0] == Hd
    bf = lambda a: a.astype(jnp.bfloat16)

    S, B = src.shape
    T = trg.shape[0]

    # embedding lookups stay in plain JAX glue (tiny gathers); dropout = identity (eval mode)
    emb_src = params["enc_emb"][src]                     # (S, B, E)
    trg_emb = params["dec_emb"][trg]                     # (T, B, E) teacher-forcing embeddings

    # attn_w rows: [:Hd] hidden part, [Hd:Hd+H] enc-fwd part, [Hd+H:] enc-bwd part
    enc_args = (emb_src,
                bf(params["enc_wih_f"]), bf(params["enc_whh_f"]),
                params["enc_bih_f"], params["enc_bhh_f"],
                bf(params["enc_wih_b"]), bf(params["enc_whh_b"]),
                params["enc_bih_b"], params["enc_bhh_b"],
                bf(params["enc_fc_w"][:H]), bf(params["enc_fc_w"][H:]), params["enc_fc_b"],
                bf(params["attn_w"][Hd:Hd + H]), bf(params["attn_w"][Hd + H:]), params["attn_b"])

    enc_out, enc_proj, hidden = pl.pallas_call(
        encoder_kernel,
        out_shape=(jax.ShapeDtypeStruct((S, B, 2 * H), jnp.float32),   # lane-dense (fwd|bwd)
                   jax.ShapeDtypeStruct((S, B, Hd), jnp.float32),      # hoisted attention proj
                   jax.ShapeDtypeStruct((B, Hd), jnp.float32)),
        in_specs=[_vmem_spec() for _ in enc_args],
        out_specs=(_vmem_spec(), _vmem_spec(), _vmem_spec()),
        scratch_shapes=[pltpu.VMEM((S, B, H), jnp.float32),
                        pltpu.VMEM((S, B, H), jnp.float32)],
    )(*enc_args)

    # whole decode loop fused into one launch: weights / enc_out DMA'd once, hidden stays in VMEM
    dec_args = (tf_flags, trg_emb, bf(params["dec_emb"]), hidden, enc_out, enc_proj,
                bf(params["attn_w"][:Hd]), params["attn_v"],
                bf(params["dec_wih"][:E]), bf(params["dec_wih"][E:]), bf(params["dec_whh"]),
                params["dec_bih"], params["dec_bhh"],
                bf(params["fco_w"][:Hd]), bf(params["fco_w"][Hd:Hd + 2 * H]),
                bf(params["fco_w"][Hd + 2 * H:]), params["fco_b"])

    outputs = pl.pallas_call(
        decoder_kernel,
        out_shape=jax.ShapeDtypeStruct((T, B, TRG_VOCAB), jnp.float32),
        in_specs=[pl.BlockSpec(memory_space=pltpu.MemorySpace.SMEM)]     # teacher-forcing flags
                 + [_vmem_spec() for _ in dec_args[1:]],
        out_specs=_vmem_spec(),
    )(*dec_args)
    return outputs


def attn_seq2seq_forward(src, trg, params, teacher_forcing_ratio=0.5, rng=None):
    """Mirrors AttnSeq2Seq.forward: outputs (trg_len, batch, trg_vocab), outputs[0] = 0."""
    rng = jax.random.PRNGKey(0) if rng is None else rng
    T = trg.shape[0]
    # one Bernoulli draw per decode step for the whole batch (matches the reference loop)
    u = jax.random.uniform(rng, (T,))
    tf_flags = (u < teacher_forcing_ratio).astype(jnp.int32)
    return _forward(src, trg, tf_flags, params)


# ---------------- deterministic parameter init (shapes implied by the module) ----------------
def init_params(key):
    def nrm(k, shape, scale=0.1):
        return (scale * jax.random.normal(k, shape)).astype(jnp.float32)

    keys = iter(jax.random.split(key, 32))
    p = {}
    p["enc_emb"] = nrm(next(keys), (SRC_VOCAB, EMB_DIM))
    p["dec_emb"] = nrm(next(keys), (TRG_VOCAB, EMB_DIM))
    # encoder bidirectional GRU (weights stored transposed: (in, 3H))
    for d in ("f", "b"):
        p[f"enc_wih_{d}"] = nrm(next(keys), (EMB_DIM, 3 * ENC_HID))
        p[f"enc_whh_{d}"] = nrm(next(keys), (ENC_HID, 3 * ENC_HID))
        p[f"enc_bih_{d}"] = nrm(next(keys), (1, 3 * ENC_HID))
        p[f"enc_bhh_{d}"] = nrm(next(keys), (1, 3 * ENC_HID))
    p["enc_fc_w"] = nrm(next(keys), (2 * ENC_HID, DEC_HID))
    p["enc_fc_b"] = nrm(next(keys), (1, DEC_HID))
    # attention (input ordering matches torch.cat((hidden, encoder_outputs), dim=2))
    p["attn_w"] = nrm(next(keys), (DEC_HID + 2 * ENC_HID, DEC_HID))
    p["attn_b"] = nrm(next(keys), (1, DEC_HID))
    p["attn_v"] = nrm(next(keys), (1, DEC_HID))           # v: Linear(dec_hid, 1, bias=False)
    # decoder GRU: input = emb + 2*enc_hid
    p["dec_wih"] = nrm(next(keys), (EMB_DIM + 2 * ENC_HID, 3 * DEC_HID))
    p["dec_whh"] = nrm(next(keys), (DEC_HID, 3 * DEC_HID))
    p["dec_bih"] = nrm(next(keys), (1, 3 * DEC_HID))
    p["dec_bhh"] = nrm(next(keys), (1, 3 * DEC_HID))
    # fc_out: in = dec_hid + 2*enc_hid + emb
    p["fco_w"] = nrm(next(keys), (DEC_HID + 2 * ENC_HID + EMB_DIM, TRG_VOCAB))
    p["fco_b"] = nrm(next(keys), (1, TRG_VOCAB))
    return p


if __name__ == "__main__":
    key = jax.random.PRNGKey(0)
    pkey, skey, tkey, fkey = jax.random.split(key, 4)
    params = init_params(pkey)
    src = jax.random.randint(skey, (SRC_LEN, BATCH), 0, SRC_VOCAB, dtype=jnp.int32)
    trg = jax.random.randint(tkey, (TRG_LEN, BATCH), 0, TRG_VOCAB, dtype=jnp.int32)

    outputs = attn_seq2seq_forward(src, trg, params, teacher_forcing_ratio=0.5, rng=fkey)
    outputs = jax.block_until_ready(outputs)

    assert outputs.shape == (TRG_LEN, BATCH, TRG_VOCAB)
    assert bool(jnp.all(jnp.isfinite(outputs)))
    assert bool(jnp.all(outputs[0] == 0.0))               # outputs[0] stays zero, as in PyTorch
    print("KERNEL_OK")
</pallas_src>

<mosaic_0001>
module attributes {stable_mosaic.version = 11 : i64} {
  func.func @encoder_kernel(%arg0: memref<7x2x32xf32, #tpu.memory_space<vmem>>, %arg1: memref<32x96xbf16, #tpu.memory_space<vmem>>, %arg2: memref<32x96xbf16, #tpu.memory_space<vmem>>, %arg3: memref<1x96xf32, #tpu.memory_space<vmem>>, %arg4: memref<1x96xf32, #tpu.memory_space<vmem>>, %arg5: memref<32x96xbf16, #tpu.memory_space<vmem>>, %arg6: memref<32x96xbf16, #tpu.memory_space<vmem>>, %arg7: memref<1x96xf32, #tpu.memory_space<vmem>>, %arg8: memref<1x96xf32, #tpu.memory_space<vmem>>, %arg9: memref<32x32xbf16, #tpu.memory_space<vmem>>, %arg10: memref<32x32xbf16, #tpu.memory_space<vmem>>, %arg11: memref<1x32xf32, #tpu.memory_space<vmem>>, %arg12: memref<32x32xbf16, #tpu.memory_space<vmem>>, %arg13: memref<32x32xbf16, #tpu.memory_space<vmem>>, %arg14: memref<1x32xf32, #tpu.memory_space<vmem>>, %arg15: memref<7x2x64xf32, #tpu.memory_space<vmem>>, %arg16: memref<7x2x32xf32, #tpu.memory_space<vmem>>, %arg17: memref<2x32xf32, #tpu.memory_space<vmem>>, %arg18: memref<7x2x32xf32, #tpu.memory_space<vmem>>, %arg19: memref<7x2x32xf32, #tpu.memory_space<vmem>>) attributes {dimension_semantics = [], scalar_prefetch = 0 : i64, scratch_operands = 2 : i64, tpu.core_type = #tpu.core_type<tc>} {
    %c0 = arith.constant 0 : index
    %c0_0 = arith.constant 0 : index
    %0 = vector.load %arg1[%c0, %c0_0] : memref<32x96xbf16, #tpu.memory_space<vmem>>, vector<32x96xbf16>
    %c0_1 = arith.constant 0 : index
    %c0_2 = arith.constant 0 : index
    %1 = vector.load %arg2[%c0_1, %c0_2] : memref<32x96xbf16, #tpu.memory_space<vmem>>, vector<32x96xbf16>
    %c0_3 = arith.constant 0 : index
    %c0_4 = arith.constant 0 : index
    %2 = vector.load %arg3[%c0_3, %c0_4] : memref<1x96xf32, #tpu.memory_space<vmem>>, vector<1x96xf32>
    %c0_5 = arith.constant 0 : index
    %c0_6 = arith.constant 0 : index
    %3 = vector.load %arg4[%c0_5, %c0_6] : memref<1x96xf32, #tpu.memory_space<vmem>>, vector<1x96xf32>
    %c0_7 = arith.constant 0 : index
    %c0_8 = arith.constant 0 : index
    %4 = vector.load %arg5[%c0_7, %c0_8] : memref<32x96xbf16, #tpu.memory_space<vmem>>, vector<32x96xbf16>
    %c0_9 = arith.constant 0 : index
    %c0_10 = arith.constant 0 : index
    %5 = vector.load %arg6[%c0_9, %c0_10] : memref<32x96xbf16, #tpu.memory_space<vmem>>, vector<32x96xbf16>
    %c0_11 = arith.constant 0 : index
    %c0_12 = arith.constant 0 : index
    %6 = vector.load %arg7[%c0_11, %c0_12] : memref<1x96xf32, #tpu.memory_space<vmem>>, vector<1x96xf32>
    %c0_13 = arith.constant 0 : index
    %c0_14 = arith.constant 0 : index
    %7 = vector.load %arg8[%c0_13, %c0_14] : memref<1x96xf32, #tpu.memory_space<vmem>>, vector<1x96xf32>
    %cst = arith.constant 0.000000e+00 : f32
    %8 = vector.broadcast %cst : f32 to vector<2x32xf32>
    %c0_i32 = arith.constant 0 : i32
    %c7_i32 = arith.constant 7 : i32
    %9 = arith.addi %c0_i32, %c7_i32 : i32
    %c1_i32 = arith.constant 1 : i32
    %10:2 = scf.for %arg20 = %c0_i32 to %9 step %c1_i32 iter_args(%arg21 = %8, %arg22 = %8) -> (vector<2x32xf32>, vector<2x32xf32>)  : i32 {
      %41 = arith.index_cast %arg20 : i32 to index
      %c0_48 = arith.constant 0 : index
      %c0_49 = arith.constant 0 : index
      %42 = vector.load %arg0[%41, %c0_48, %c0_49] : memref<7x2x32xf32, #tpu.memory_space<vmem>>, vector<1x2x32xf32>
      %43 = vector.shape_cast %42 : vector<1x2x32xf32> to vector<2x32xf32>
      %44 = arith.truncf %43 : vector<2x32xf32> to vector<2x32xbf16>
      %c6_i32 = arith.constant 6 : i32
      %45 = arith.subi %c6_i32, %arg20 : i32
      %46 = arith.index_cast %45 : i32 to index
      %c0_50 = arith.constant 0 : index
      %c0_51 = arith.constant 0 : index
      %47 = vector.load %arg0[%46, %c0_50, %c0_51] : memref<7x2x32xf32, #tpu.memory_space<vmem>>, vector<1x2x32xf32>
      %48 = vector.shape_cast %47 : vector<1x2x32xf32> to vector<2x32xf32>
      %49 = arith.truncf %48 : vector<2x32xf32> to vector<2x32xbf16>
      %cst_52 = arith.constant dense<0.000000e+00> : vector<2x96xf32>
      %50 = tpu.matmul %44, %0, %cst_52 {dimension_numbers = #tpu.dot_dimension_numbers<[1], [0], [0], [1], [0, 0, 1, 1], [], []>} : vector<2x32xbf16>, vector<32x96xbf16>, vector<2x96xf32> -> vector<2x96xf32>
      %51 = vector.broadcast %2 : vector<1x96xf32> to vector<2x96xf32>
      %52 = arith.addf %50, %51 : vector<2x96xf32>
      %53 = arith.truncf %arg21 : vector<2x32xf32> to vector<2x32xbf16>
      %cst_53 = arith.constant dense<0.000000e+00> : vector<2x96xf32>
      %54 = tpu.matmul %53, %1, %cst_53 {dimension_numbers = #tpu.dot_dimension_numbers<[1], [0], [0], [1], [0, 0, 1, 1], [], []>} : vector<2x32xbf16>, vector<32x96xbf16>, vector<2x96xf32> -> vector<2x96xf32>
      %55 = vector.broadcast %3 : vector<1x96xf32> to vector<2x96xf32>
      %56 = arith.addf %54, %55 : vector<2x96xf32>
      %57 = vector.extract_strided_slice %52 {offsets = [0, 0], sizes = [2, 32], strides = [1, 1]} : vector<2x96xf32> to vector<2x32xf32>
      %58 = vector.extract_strided_slice %56 {offsets = [0, 0], sizes = [2, 32], strides = [1, 1]} : vector<2x96xf32> to vector<2x32xf32>
      %59 = arith.addf %57, %58 : vector<2x32xf32>
      %60 = arith.negf %59 : vector<2x32xf32>
      %61 = math.exp %60 : vector<2x32xf32>
      %cst_54 = arith.constant 1.000000e+00 : f32
      %62 = vector.broadcast %cst_54 : f32 to vector<2x32xf32>
      %63 = arith.addf %62, %61 : vector<2x32xf32>
      %64 = arith.divf %62, %63 : vector<2x32xf32>
      %65 = vector.extract_strided_slice %52 {offsets = [0, 32], sizes = [2, 32], strides = [1, 1]} : vector<2x96xf32> to vector<2x32xf32>
      %66 = vector.extract_strided_slice %56 {offsets = [0, 32], sizes = [2, 32], strides = [1, 1]} : vector<2x96xf32> to vector<2x32xf32>
      %67 = arith.addf %65, %66 : vector<2x32xf32>
      %68 = arith.negf %67 : vector<2x32xf32>
      %69 = math.exp %68 : vector<2x32xf32>
      %cst_55 = arith.constant 1.000000e+00 : f32
      %70 = vector.broadcast %cst_55 : f32 to vector<2x32xf32>
      %71 = arith.addf %70, %69 : vector<2x32xf32>
      %72 = arith.divf %70, %71 : vector<2x32xf32>
      %73 = vector.extract_strided_slice %52 {offsets = [0, 64], sizes = [2, 32], strides = [1, 1]} : vector<2x96xf32> to vector<2x32xf32>
      %74 = vector.extract_strided_slice %56 {offsets = [0, 64], sizes = [2, 32], strides = [1, 1]} : vector<2x96xf32> to vector<2x32xf32>
      %75 = arith.mulf %64, %74 : vector<2x32xf32>
      %76 = arith.addf %73, %75 : vector<2x32xf32>
      %77 = math.tanh %76 : vector<2x32xf32>
      %cst_56 = arith.constant 1.000000e+00 : f32
      %78 = vector.broadcast %cst_56 : f32 to vector<2x32xf32>
      %79 = arith.subf %78, %72 : vector<2x32xf32>
      %80 = arith.mulf %79, %77 : vector<2x32xf32>
      %81 = arith.mulf %72, %arg21 : vector<2x32xf32>
      %82 = arith.addf %80, %81 : vector<2x32xf32>
      %cst_57 = arith.constant dense<0.000000e+00> : vector<2x96xf32>
      %83 = tpu.matmul %49, %4, %cst_57 {dimension_numbers = #tpu.dot_dimension_numbers<[1], [0], [0], [1], [0, 0, 1, 1], [], []>} : vector<2x32xbf16>, vector<32x96xbf16>, vector<2x96xf32> -> vector<2x96xf32>
      %84 = vector.broadcast %6 : vector<1x96xf32> to vector<2x96xf32>
      %85 = arith.addf %83, %84 : vector<2x96xf32>
      %86 = arith.truncf %arg22 : vector<2x32xf32> to vector<2x32xbf16>
      %cst_58 = arith.constant dense<0.000000e+00> : vector<2x96xf32>
      %87 = tpu.matmul %86, %5, %cst_58 {dimension_numbers = #tpu.dot_dimension_numbers<[1], [0], [0], [1], [0, 0, 1, 1], [], []>} : vector<2x32xbf16>, vector<32x96xbf16>, vector<2x96xf32> -> vector<2x96xf32>
      %88 = vector.broadcast %7 : vector<1x96xf32> to vector<2x96xf32>
      %89 = arith.addf %87, %88 : vector<2x96xf32>
      %90 = vector.extract_strided_slice %85 {offsets = [0, 0], sizes = [2, 32], strides = [1, 1]} : vector<2x96xf32> to vector<2x32xf32>
      %91 = vector.extract_strided_slice %89 {offsets = [0, 0], sizes = [2, 32], strides = [1, 1]} : vector<2x96xf32> to vector<2x32xf32>
      %92 = arith.addf %90, %91 : vector<2x32xf32>
      %93 = arith.negf %92 : vector<2x32xf32>
      %94 = math.exp %93 : vector<2x32xf32>
      %cst_59 = arith.constant 1.000000e+00 : f32
      %95 = vector.broadcast %cst_59 : f32 to vector<2x32xf32>
      %96 = arith.addf %95, %94 : vector<2x32xf32>
      %97 = arith.divf %95, %96 : vector<2x32xf32>
      %98 = vector.extract_strided_slice %85 {offsets = [0, 32], sizes = [2, 32], strides = [1, 1]} : vector<2x96xf32> to vector<2x32xf32>
      %99 = vector.extract_strided_slice %89 {offsets = [0, 32], sizes = [2, 32], strides = [1, 1]} : vector<2x96xf32> to vector<2x32xf32>
      %100 = arith.addf %98, %99 : vector<2x32xf32>
      %101 = arith.negf %100 : vector<2x32xf32>
      %102 = math.exp %101 : vector<2x32xf32>
      %cst_60 = arith.constant 1.000000e+00 : f32
      %103 = vector.broadcast %cst_60 : f32 to vector<2x32xf32>
      %104 = arith.addf %103, %102 : vector<2x32xf32>
      %105 = arith.divf %103, %104 : vector<2x32xf32>
      %106 = vector.extract_strided_slice %85 {offsets = [0, 64], sizes = [2, 32], strides = [1, 1]} : vector<2x96xf32> to vector<2x32xf32>
      %107 = vector.extract_strided_slice %89 {offsets = [0, 64], sizes = [2, 32], strides = [1, 1]} : vector<2x96xf32> to vector<2x32xf32>
      %108 = arith.mulf %97, %107 : vector<2x32xf32>
      %109 = arith.addf %106, %108 : vector<2x32xf32>
      %110 = math.tanh %109 : vector<2x32xf32>
      %cst_61 = arith.constant 1.000000e+00 : f32
      %111 = vector.broadcast %cst_61 : f32 to vector<2x32xf32>
      %112 = arith.subf %111, %105 : vector<2x32xf32>
      %113 = arith.mulf %112, %110 : vector<2x32xf32>
      %114 = arith.mulf %105, %arg22 : vector<2x32xf32>
      %115 = arith.addf %113, %114 : vector<2x32xf32>
      %116 = arith.index_cast %arg20 : i32 to index
      %c0_62 = arith.constant 0 : index
      %c0_63 = arith.constant 0 : index
      %117 = vector.load %arg18[%116, %c0_62, %c0_63] : memref<7x2x32xf32, #tpu.memory_space<vmem>>, vector<1x2x32xf32>
      %118 = vector.shape_cast %117 : vector<1x2x32xf32> to vector<2x32xf32>
      %119 = vector.shape_cast %82 : vector<2x32xf32> to vector<1x2x32xf32>
      tpu.vector_store %arg18[%116, %c0_62, %c0_63], %119 {strides = array<i32>} : memref<7x2x32xf32, #tpu.memory_space<vmem>>, vector<1x2x32xf32>,
      %c6_i32_64 = arith.constant 6 : i32
      %120 = arith.subi %c6_i32_64, %arg20 : i32
      %121 = arith.index_cast %120 : i32 to index
      %c0_65 = arith.constant 0 : index
      %c0_66 = arith.constant 0 : index
      %122 = vector.load %arg19[%121, %c0_65, %c0_66] : memref<7x2x32xf32, #tpu.memory_space<vmem>>, vector<1x2x32xf32>
      %123 = vector.shape_cast %122 : vector<1x2x32xf32> to vector<2x32xf32>
      %124 = vector.shape_cast %115 : vector<2x32xf32> to vector<1x2x32xf32>
      tpu.vector_store %arg19[%121, %c0_65, %c0_66], %124 {strides = array<i32>} : memref<7x2x32xf32, #tpu.memory_space<vmem>>, vector<1x2x32xf32>,
      scf.yield %82, %115 : vector<2x32xf32>, vector<2x32xf32>
    }
    %c7_i32_15 = arith.constant 7 : i32
    %11 = arith.truncf %10#0 : vector<2x32xf32> to vector<2x32xbf16>
    %c0_16 = arith.constant 0 : index
    %c0_17 = arith.constant 0 : index
    %12 = vector.load %arg9[%c0_16, %c0_17] : memref<32x32xbf16, #tpu.memory_space<vmem>>, vector<32x32xbf16>
    %cst_18 = arith.constant dense<0.000000e+00> : vector<2x32xf32>
    %13 = tpu.matmul %11, %12, %cst_18 {dimension_numbers = #tpu.dot_dimension_numbers<[1], [0], [0], [1], [0, 0, 1, 1], [], []>} : vector<2x32xbf16>, vector<32x32xbf16>, vector<2x32xf32> -> vector<2x32xf32>
    %14 = arith.truncf %10#1 : vector<2x32xf32> to vector<2x32xbf16>
    %c0_19 = arith.constant 0 : index
    %c0_20 = arith.constant 0 : index
    %15 = vector.load %arg10[%c0_19, %c0_20] : memref<32x32xbf16, #tpu.memory_space<vmem>>, vector<32x32xbf16>
    %cst_21 = arith.constant dense<0.000000e+00> : vector<2x32xf32>
    %16 = tpu.matmul %14, %15, %cst_21 {dimension_numbers = #tpu.dot_dimension_numbers<[1], [0], [0], [1], [0, 0, 1, 1], [], []>} : vector<2x32xbf16>, vector<32x32xbf16>, vector<2x32xf32> -> vector<2x32xf32>
    %17 = arith.addf %13, %16 : vector<2x32xf32>
    %c0_22 = arith.constant 0 : index
    %c0_23 = arith.constant 0 : index
    %18 = vector.load %arg11[%c0_22, %c0_23] : memref<1x32xf32, #tpu.memory_space<vmem>>, vector<1x32xf32>
    %19 = vector.broadcast %18 : vector<1x32xf32> to vector<2x32xf32>
    %20 = arith.addf %17, %19 : vector<2x32xf32>
    %21 = math.tanh %20 : vector<2x32xf32>
    %c0_24 = arith.constant 0 : index
    %c0_25 = arith.constant 0 : index
    %22 = vector.load %arg17[%c0_24, %c0_25] : memref<2x32xf32, #tpu.memory_space<vmem>>, vector<2x32xf32>
    tpu.vector_store %arg17[%c0_24, %c0_25], %21 {strides = array<i32>} : memref<2x32xf32, #tpu.memory_space<vmem>>, vector<2x32xf32>,
    %c0_26 = arith.constant 0 : index
    %c0_27 = arith.constant 0 : index
    %c0_28 = arith.constant 0 : index
    %23 = vector.load %arg18[%c0_26, %c0_27, %c0_28] : memref<7x2x32xf32, #tpu.memory_space<vmem>>, vector<7x2x32xf32>
    %c0_29 = arith.constant 0 : index
    %c0_30 = arith.constant 0 : index
    %c0_31 = arith.constant 0 : index
    %24 = vector.load %arg19[%c0_29, %c0_30, %c0_31] : memref<7x2x32xf32, #tpu.memory_space<vmem>>, vector<7x2x32xf32>
    %c0_32 = arith.constant 0 : index
    %c0_33 = arith.constant 0 : index
    %c0_34 = arith.constant 0 : index
    %25 = vector.load %arg15[%c0_32, %c0_33, %c0_34] : memref<7x2x64xf32, #tpu.memory_space<vmem>>, vector<7x2x32xf32>
    tpu.vector_store %arg15[%c0_32, %c0_33, %c0_34], %23 {strides = array<i32>} : memref<7x2x64xf32, #tpu.memory_space<vmem>>, vector<7x2x32xf32>,
    %c0_35 = arith.constant 0 : index
    %c0_36 = arith.constant 0 : index
    %c32 = arith.constant 32 : index
    %26 = vector.load %arg15[%c0_35, %c0_36, %c32] : memref<7x2x64xf32, #tpu.memory_space<vmem>>, vector<7x2x32xf32>
    tpu.vector_store %arg15[%c0_35, %c0_36, %c32], %24 {strides = array<i32>} : memref<7x2x64xf32, #tpu.memory_space<vmem>>, vector<7x2x32xf32>,
    %27 = vector.shape_cast %23 : vector<7x2x32xf32> to vector<14x32xf32>
    %28 = arith.truncf %27 : vector<14x32xf32> to vector<14x32xbf16>
    %29 = vector.shape_cast %24 : vector<7x2x32xf32> to vector<14x32xf32>
    %30 = arith.truncf %29 : vector<14x32xf32> to vector<14x32xbf16>
    %c0_37 = arith.constant 0 : index
    %c0_38 = arith.constant 0 : index
    %31 = vector.load %arg12[%c0_37, %c0_38] : memref<32x32xbf16, #tpu.memory_space<vmem>>, vector<32x32xbf16>
    %cst_39 = arith.constant dense<0.000000e+00> : vector<14x32xf32>
    %32 = tpu.matmul %28, %31, %cst_39 {dimension_numbers = #tpu.dot_dimension_numbers<[1], [0], [0], [1], [0, 0, 1, 1], [], []>} : vector<14x32xbf16>, vector<32x32xbf16>, vector<14x32xf32> -> vector<14x32xf32>
    %c0_40 = arith.constant 0 : index
    %c0_41 = arith.constant 0 : index
    %33 = vector.load %arg13[%c0_40, %c0_41] : memref<32x32xbf16, #tpu.memory_space<vmem>>, vector<32x32xbf16>
    %cst_42 = arith.constant dense<0.000000e+00> : vector<14x32xf32>
    %34 = tpu.matmul %30, %33, %cst_42 {dimension_numbers = #tpu.dot_dimension_numbers<[1], [0], [0], [1], [0, 0, 1, 1], [], []>} : vector<14x32xbf16>, vector<32x32xbf16>, vector<14x32xf32> -> vector<14x32xf32>
    %35 = arith.addf %32, %34 : vector<14x32xf32>
    %c0_43 = arith.constant 0 : index
    %c0_44 = arith.constant 0 : index
    %36 = vector.load %arg14[%c0_43, %c0_44] : memref<1x32xf32, #tpu.memory_space<vmem>>, vector<1x32xf32>
    %37 = vector.broadcast %36 : vector<1x32xf32> to vector<14x32xf32>
    %38 = arith.addf %35, %37 : vector<14x32xf32>
    %39 = vector.shape_cast %38 : vector<14x32xf32> to vector<7x2x32xf32>
    %c0_45 = arith.constant 0 : index
    %c0_46 = arith.constant 0 : index
    %c0_47 = arith.constant 0 : index
    %40 = vector.load %arg16[%c0_45, %c0_46, %c0_47] : memref<7x2x32xf32, #tpu.memory_space<vmem>>, vector<7x2x32xf32>
    tpu.vector_store %arg16[%c0_45, %c0_46, %c0_47], %39 {strides = array<i32>} : memref<7x2x32xf32, #tpu.memory_space<vmem>>, vector<7x2x32xf32>,
    return
  }
}

module attributes {stable_mosaic.version = 11 : i64} {
  func.func @decoder_kernel(%arg0: memref<8xi32, #tpu.memory_space<smem>>, %arg1: memref<8x2x32xf32, #tpu.memory_space<vmem>>, %arg2: memref<20x32xbf16, #tpu.memory_space<vmem>>, %arg3: memref<2x32xf32, #tpu.memory_space<vmem>>, %arg4: memref<7x2x64xf32, #tpu.memory_space<vmem>>, %arg5: memref<7x2x32xf32, #tpu.memory_space<vmem>>, %arg6: memref<32x32xbf16, #tpu.memory_space<vmem>>, %arg7: memref<1x32xf32, #tpu.memory_space<vmem>>, %arg8: memref<32x96xbf16, #tpu.memory_space<vmem>>, %arg9: memref<64x96xbf16, #tpu.memory_space<vmem>>, %arg10: memref<32x96xbf16, #tpu.memory_space<vmem>>, %arg11: memref<1x96xf32, #tpu.memory_space<vmem>>, %arg12: memref<1x96xf32, #tpu.memory_space<vmem>>, %arg13: memref<32x20xbf16, #tpu.memory_space<vmem>>, %arg14: memref<64x20xbf16, #tpu.memory_space<vmem>>, %arg15: memref<32x20xbf16, #tpu.memory_space<vmem>>, %arg16: memref<1x20xf32, #tpu.memory_space<vmem>>, %arg17: memref<8x2x20xf32, #tpu.memory_space<vmem>>) attributes {dimension_semantics = [], scalar_prefetch = 0 : i64, scratch_operands = 0 : i64, tpu.core_type = #tpu.core_type<tc>} {
    %c0 = arith.constant 0 : index
    %c0_0 = arith.constant 0 : index
    %c0_1 = arith.constant 0 : index
    %0 = vector.load %arg4[%c0, %c0_0, %c0_1] : memref<7x2x64xf32, #tpu.memory_space<vmem>>, vector<7x2x64xf32>
    %c0_2 = arith.constant 0 : index
    %c0_3 = arith.constant 0 : index
    %c0_4 = arith.constant 0 : index
    %1 = vector.load %arg5[%c0_2, %c0_3, %c0_4] : memref<7x2x32xf32, #tpu.memory_space<vmem>>, vector<7x2x32xf32>
    %c0_5 = arith.constant 0 : index
    %c0_6 = arith.constant 0 : index
    %2 = vector.load %arg6[%c0_5, %c0_6] : memref<32x32xbf16, #tpu.memory_space<vmem>>, vector<32x32xbf16>
    %c0_7 = arith.constant 0 : index
    %c0_8 = arith.constant 0 : index
    %3 = vector.load %arg7[%c0_7, %c0_8] : memref<1x32xf32, #tpu.memory_space<vmem>>, vector<1x32xf32>
    %c0_9 = arith.constant 0 : index
    %c0_10 = arith.constant 0 : index
    %4 = vector.load %arg2[%c0_9, %c0_10] : memref<20x32xbf16, #tpu.memory_space<vmem>>, vector<20x32xbf16>
    %c0_11 = arith.constant 0 : index
    %c0_12 = arith.constant 0 : index
    %5 = vector.load %arg8[%c0_11, %c0_12] : memref<32x96xbf16, #tpu.memory_space<vmem>>, vector<32x96xbf16>
    %c0_13 = arith.constant 0 : index
    %c0_14 = arith.constant 0 : index
    %6 = vector.load %arg9[%c0_13, %c0_14] : memref<64x96xbf16, #tpu.memory_space<vmem>>, vector<64x96xbf16>
    %c0_15 = arith.constant 0 : index
    %c0_16 = arith.constant 0 : index
    %7 = vector.load %arg10[%c0_15, %c0_16] : memref<32x96xbf16, #tpu.memory_space<vmem>>, vector<32x96xbf16>
    %c0_17 = arith.constant 0 : index
    %c0_18 = arith.constant 0 : index
    %8 = vector.load %arg11[%c0_17, %c0_18] : memref<1x96xf32, #tpu.memory_space<vmem>>, vector<1x96xf32>
    %c0_19 = arith.constant 0 : index
    %c0_20 = arith.constant 0 : index
    %9 = vector.load %arg12[%c0_19, %c0_20] : memref<1x96xf32, #tpu.memory_space<vmem>>, vector<1x96xf32>
    %c0_21 = arith.constant 0 : index
    %c0_22 = arith.constant 0 : index
    %10 = vector.load %arg13[%c0_21, %c0_22] : memref<32x20xbf16, #tpu.memory_space<vmem>>, vector<32x20xbf16>
    %c0_23 = arith.constant 0 : index
    %c0_24 = arith.constant 0 : index
    %11 = vector.load %arg14[%c0_23, %c0_24] : memref<64x20xbf16, #tpu.memory_space<vmem>>, vector<64x20xbf16>
    %c0_25 = arith.constant 0 : index
    %c0_26 = arith.constant 0 : index
    %12 = vector.load %arg15[%c0_25, %c0_26] : memref<32x20xbf16, #tpu.memory_space<vmem>>, vector<32x20xbf16>
    %c0_27 = arith.constant 0 : index
    %c0_28 = arith.constant 0 : index
    %13 = vector.load %arg16[%c0_27, %c0_28] : memref<1x20xf32, #tpu.memory_space<vmem>>, vector<1x20xf32>
    %cst = arith.constant 0.000000e+00 : f32
    %14 = vector.broadcast %cst : f32 to vector<2x20xf32>
    %c0_29 = arith.constant 0 : index
    %c0_30 = arith.constant 0 : index
    %c0_31 = arith.constant 0 : index
    %15 = vector.load %arg17[%c0_29, %c0_30, %c0_31] : memref<8x2x20xf32, #tpu.memory_space<vmem>>, vector<1x2x20xf32>
    %16 = vector.shape_cast %15 : vector<1x2x20xf32> to vector<2x20xf32>
    %17 = vector.shape_cast %14 : vector<2x20xf32> to vector<1x2x20xf32>
    tpu.vector_store %arg17[%c0_29, %c0_30, %c0_31], %17 {strides = array<i32>} : memref<8x2x20xf32, #tpu.memory_space<vmem>>, vector<1x2x20xf32>,
    %c0_32 = arith.constant 0 : index
    %c0_33 = arith.constant 0 : index
    %c0_34 = arith.constant 0 : index
    %18 = vector.load %arg1[%c0_32, %c0_33, %c0_34] : memref<8x2x32xf32, #tpu.memory_space<vmem>>, vector<1x2x32xf32>
    %19 = vector.shape_cast %18 : vector<1x2x32xf32> to vector<2x32xf32>
    %c0_35 = arith.constant 0 : index
    %c0_36 = arith.constant 0 : index
    %20 = vector.load %arg3[%c0_35, %c0_36] : memref<2x32xf32, #tpu.memory_space<vmem>>, vector<2x32xf32>
    %c1_i32 = arith.constant 1 : i32
    %c7_i32 = arith.constant 7 : i32
    %21 = arith.addi %c1_i32, %c7_i32 : i32
    %c1_i32_37 = arith.constant 1 : i32
    %22:2 = scf.for %arg18 = %c1_i32 to %21 step %c1_i32_37 iter_args(%arg19 = %19, %arg20 = %20) -> (vector<2x32xf32>, vector<2x32xf32>)  : i32 {
      %23 = arith.truncf %arg19 : vector<2x32xf32> to vector<2x32xbf16>
      %24 = arith.truncf %arg20 : vector<2x32xf32> to vector<2x32xbf16>
      %cst_39 = arith.constant dense<0.000000e+00> : vector<2x32xf32>
      %25 = tpu.matmul %24, %2, %cst_39 {dimension_numbers = #tpu.dot_dimension_numbers<[1], [0], [0], [1], [0, 0, 1, 1], [], []>} : vector<2x32xbf16>, vector<32x32xbf16>, vector<2x32xf32> -> vector<2x32xf32>
      %26 = vector.shape_cast %25 : vector<2x32xf32> to vector<1x2x32xf32>
      %27 = vector.broadcast %26 : vector<1x2x32xf32> to vector<7x2x32xf32>
      %28 = arith.addf %1, %27 : vector<7x2x32xf32>
      %29 = math.tanh %28 : vector<7x2x32xf32>
      %30 = vector.shape_cast %3 : vector<1x32xf32> to vector<1x1x32xf32>
      %31 = vector.broadcast %30 : vector<1x1x32xf32> to vector<7x2x32xf32>
      %32 = arith.mulf %29, %31 : vector<7x2x32xf32>
      %cst_40 = arith.constant dense<0.000000e+00> : vector<7x2xf32>
      %33 = vector.multi_reduction <add>, %32, %cst_40 [2] : vector<7x2x32xf32> to vector<7x2xf32>
      %34 = vector.shape_cast %33 : vector<7x2xf32> to vector<7x2x1xf32>
      %cst_41 = arith.constant dense<0xFF800000> : vector<2x1xf32>
      %35 = vector.multi_reduction <maximumf>, %34, %cst_41 [0] : vector<7x2x1xf32> to vector<2x1xf32>
      %36 = vector.shape_cast %35 : vector<2x1xf32> to vector<1x2x1xf32>
      %37 = vector.broadcast %36 : vector<1x2x1xf32> to vector<7x2x1xf32>
      %38 = arith.subf %34, %37 : vector<7x2x1xf32>
      %39 = math.exp %38 : vector<7x2x1xf32>
      %cst_42 = arith.constant dense<0.000000e+00> : vector<2x1xf32>
      %40 = vector.multi_reduction <add>, %39, %cst_42 [0] : vector<7x2x1xf32> to vector<2x1xf32>
      %41 = vector.shape_cast %40 : vector<2x1xf32> to vector<1x2x1xf32>
      %42 = tpu.reciprocal %41 {approx = true} : vector<1x2x1xf32> -> vector<1x2x1xf32>
      %43 = vector.broadcast %42 : vector<1x2x1xf32> to vector<7x2x1xf32>
      %44 = arith.mulf %39, %43 : vector<7x2x1xf32>
      %45 = vector.broadcast %44 : vector<7x2x1xf32> to vector<7x2x64xf32>
      %46 = arith.mulf %45, %0 : vector<7x2x64xf32>
      %cst_43 = arith.constant dense<0.000000e+00> : vector<2x64xf32>
      %47 = vector.multi_reduction <add>, %46, %cst_43 [0] : vector<7x2x64xf32> to vector<2x64xf32>
      %48 = arith.truncf %47 : vector<2x64xf32> to vector<2x64xbf16>
      %cst_44 = arith.constant dense<0.000000e+00> : vector<2x96xf32>
      %49 = tpu.matmul %23, %5, %cst_44 {dimension_numbers = #tpu.dot_dimension_numbers<[1], [0], [0], [1], [0, 0, 1, 1], [], []>} : vector<2x32xbf16>, vector<32x96xbf16>, vector<2x96xf32> -> vector<2x96xf32>
      %cst_45 = arith.constant dense<0.000000e+00> : vector<2x96xf32>
      %50 = tpu.matmul %48, %6, %cst_45 {dimension_numbers = #tpu.dot_dimension_numbers<[1], [0], [0], [1], [0, 0, 1, 1], [], []>} : vector<2x64xbf16>, vector<64x96xbf16>, vector<2x96xf32> -> vector<2x96xf32>
      %51 = arith.addf %49, %50 : vector<2x96xf32>
      %52 = vector.broadcast %8 : vector<1x96xf32> to vector<2x96xf32>
      %53 = arith.addf %51, %52 : vector<2x96xf32>
      %cst_46 = arith.constant dense<0.000000e+00> : vector<2x96xf32>
      %54 = tpu.matmul %24, %7, %cst_46 {dimension_numbers = #tpu.dot_dimension_numbers<[1], [0], [0], [1], [0, 0, 1, 1], [], []>} : vector<2x32xbf16>, vector<32x96xbf16>, vector<2x96xf32> -> vector<2x96xf32>
      %55 = vector.broadcast %9 : vector<1x96xf32> to vector<2x96xf32>
      %56 = arith.addf %54, %55 : vector<2x96xf32>
      %57 = vector.extract_strided_slice %53 {offsets = [0, 0], sizes = [2, 32], strides = [1, 1]} : vector<2x96xf32> to vector<2x32xf32>
      %58 = vector.extract_strided_slice %56 {offsets = [0, 0], sizes = [2, 32], strides = [1, 1]} : vector<2x96xf32> to vector<2x32xf32>
      %59 = arith.addf %57, %58 : vector<2x32xf32>
      %60 = arith.negf %59 : vector<2x32xf32>
      %61 = math.exp %60 : vector<2x32xf32>
      %cst_47 = arith.constant 1.000000e+00 : f32
      %62 = vector.broadcast %cst_47 : f32 to vector<2x32xf32>
      %63 = arith.addf %62, %61 : vector<2x32xf32>
      %64 = arith.divf %62, %63 : vector<2x32xf32>
      %65 = vector.extract_strided_slice %53 {offsets = [0, 32], sizes = [2, 32], strides = [1, 1]} : vector<2x96xf32> to vector<2x32xf32>
      %66 = vector.extract_strided_slice %56 {offsets = [0, 32], sizes = [2, 32], strides = [1, 1]} : vector<2x96xf32> to vector<2x32xf32>
      %67 = arith.addf %65, %66 : vector<2x32xf32>
      %68 = arith.negf %67 : vector<2x32xf32>
      %69 = math.exp %68 : vector<2x32xf32>
      %cst_48 = arith.constant 1.000000e+00 : f32
      %70 = vector.broadcast %cst_48 : f32 to vector<2x32xf32>
      %71 = arith.addf %70, %69 : vector<2x32xf32>
      %72 = arith.divf %70, %71 : vector<2x32xf32>
      %73 = vector.extract_strided_slice %53 {offsets = [0, 64], sizes = [2, 32], strides = [1, 1]} : vector<2x96xf32> to vector<2x32xf32>
      %74 = vector.extract_strided_slice %56 {offsets = [0, 64], sizes = [2, 32], strides = [1, 1]} : vector<2x96xf32> to vector<2x32xf32>
      %75 = arith.mulf %64, %74 : vector<2x32xf32>
      %76 = arith.addf %73, %75 : vector<2x32xf32>
      %77 = math.tanh %76 : vector<2x32xf32>
      %cst_49 = arith.constant 1.000000e+00 : f32
      %78 = vector.broadcast %cst_49 : f32 to vector<2x32xf32>
      %79 = arith.subf %78, %72 : vector<2x32xf32>
      %80 = arith.mulf %79, %77 : vector<2x32xf32>
      %81 = arith.mulf %72, %arg20 : vector<2x32xf32>
      %82 = arith.addf %80, %81 : vector<2x32xf32>
      %83 = arith.truncf %82 : vector<2x32xf32> to vector<2x32xbf16>
      %cst_50 = arith.constant dense<0.000000e+00> : vector<2x20xf32>
      %84 = tpu.matmul %83, %10, %cst_50 {dimension_numbers = #tpu.dot_dimension_numbers<[1], [0], [0], [1], [0, 0, 1, 1], [], []>} : vector<2x32xbf16>, vector<32x20xbf16>, vector<2x20xf32> -> vector<2x20xf32>
      %cst_51 = arith.constant dense<0.000000e+00> : vector<2x20xf32>
      %85 = tpu.matmul %48, %11, %cst_51 {dimension_numbers = #tpu.dot_dimension_numbers<[1], [0], [0], [1], [0, 0, 1, 1], [], []>} : vector<2x64xbf16>, vector<64x20xbf16>, vector<2x20xf32> -> vector<2x20xf32>
      %86 = arith.addf %84, %85 : vector<2x20xf32>
      %cst_52 = arith.constant dense<0.000000e+00> : vector<2x20xf32>
      %87 = tpu.matmul %23, %12, %cst_52 {dimension_numbers = #tpu.dot_dimension_numbers<[1], [0], [0], [1], [0, 0, 1, 1], [], []>} : vector<2x32xbf16>, vector<32x20xbf16>, vector<2x20xf32> -> vector<2x20xf32>
      %88 = arith.addf %86, %87 : vector<2x20xf32>
      %89 = vector.broadcast %13 : vector<1x20xf32> to vector<2x20xf32>
      %90 = arith.addf %88, %89 : vector<2x20xf32>
      %91 = arith.index_cast %arg18 : i32 to index
      %c0_53 = arith.constant 0 : index
      %c0_54 = arith.constant 0 : index
      %92 = vector.load %arg17[%91, %c0_53, %c0_54] : memref<8x2x20xf32, #tpu.memory_space<vmem>>, vector<1x2x20xf32>
      %93 = vector.shape_cast %92 : vector<1x2x20xf32> to vector<2x20xf32>
      %94 = vector.shape_cast %90 : vector<2x20xf32> to vector<1x2x20xf32>
      tpu.vector_store %arg17[%91, %c0_53, %c0_54], %94 {strides = array<i32>} : memref<8x2x20xf32, #tpu.memory_space<vmem>>, vector<1x2x20xf32>,
      %95 = tpu.iota {dimensions = array<i32: 1>} : vector<2x20xi32>
      %cst_55 = arith.constant dense<0xFF800000> : vector<2xf32>
      %96 = vector.multi_reduction <maximumf>, %90, %cst_55 [1] : vector<2x20xf32> to vector<2xf32>
      %97 = vector.shape_cast %96 : vector<2xf32> to vector<2x1xf32>
      %98 = vector.broadcast %97 : vector<2x1xf32> to vector<2x20xf32>
      %99 = arith.cmpf oeq, %90, %98 : vector<2x20xf32>
      %c20_i32 = arith.constant 20 : i32
      %100 = vector.broadcast %c20_i32 : i32 to vector<2x20xi32>
      %101 = arith.select %99, %95, %100 : vector<2x20xi1>, vector<2x20xi32>
      %cst_56 = arith.constant dense<2147483647> : vector<2xi32>
      %102 = vector.multi_reduction <minsi>, %101, %cst_56 [1] : vector<2x20xi32> to vector<2xi32>
      %103 = vector.shape_cast %102 : vector<2xi32> to vector<2x1xi32>
      %104 = tpu.iota {dimensions = array<i32: 1>} : vector<2x20xi32>
      %105 = vector.broadcast %103 : vector<2x1xi32> to vector<2x20xi32>
      %106 = arith.cmpi eq, %104, %105 : vector<2x20xi32>
      %107 = arith.extui %106 : vector<2x20xi1> to vector<2x20xi32>
      %108 = arith.sitofp %107 : vector<2x20xi32> to vector<2x20xf32>
      %109 = arith.truncf %108 : vector<2x20xf32> to vector<2x20xbf16>
      %cst_57 = arith.constant dense<0.000000e+00> : vector<2x32xf32>
      %110 = tpu.matmul %109, %4, %cst_57 {dimension_numbers = #tpu.dot_dimension_numbers<[1], [0], [0], [1], [0, 0, 1, 1], [], []>} : vector<2x20xbf16>, vector<20x32xbf16>, vector<2x32xf32> -> vector<2x32xf32>
      %111 = arith.index_cast %arg18 : i32 to index
      %c0_58 = arith.constant 0 : index
      %c0_59 = arith.constant 0 : index
      %112 = vector.load %arg1[%111, %c0_58, %c0_59] : memref<8x2x32xf32, #tpu.memory_space<vmem>>, vector<1x2x32xf32>
      %113 = vector.shape_cast %112 : vector<1x2x32xf32> to vector<2x32xf32>
      %114 = arith.index_cast %arg18 : i32 to index
      %115 = memref.load %arg0[%114] : memref<8xi32, #tpu.memory_space<smem>>
      %c1_i32_60 = arith.constant 1 : i32
      %116 = arith.cmpi eq, %115, %c1_i32_60 : i32
      %117 = arith.select %116, %113, %110 : vector<2x32xf32>
      scf.yield %117, %82 : vector<2x32xf32>, vector<2x32xf32>
    }
    %c7_i32_38 = arith.constant 7 : i32
    return
  }
}

</mosaic_0001>

<llo_original>
// kernel: _forward.2
$region0: #{_forward.2}
  #allocation0 [shape = 'u32[]', space=smem, size = 0x4, offset = 0x4, fixed_abs, tag = 'smem constant byte address 0x4 - core index']
  #allocation1 [shape = 'u32[144,128]{1,0:T(1,128)}', space=vmem, size = 0x12000, scoped, tag = 'internal scratch']
  #allocation2 [shape = 'f32[7,2,32]{2,1,0:T(2,128)}', space=vmem, size = 0x1c00, scoped, tag = 'scratch operand']
  #allocation3 [shape = 'f32[7,2,32]{2,1,0:T(2,128)}', space=vmem, size = 0x1c00, scoped, tag = 'scratch operand']
  %s0 = inlined_call_operand.vmem [shape: f32[7,2,32], index: 0, kind: input, shape index: {}]
  %s1 = inlined_call_operand.vmem [shape: bf16[32,96], index: 1, kind: input, shape index: {}]
  %s2 = inlined_call_operand.vmem [shape: bf16[32,96], index: 2, kind: input, shape index: {}]
  %s3 = inlined_call_operand.vmem [shape: f32[1,96], index: 3, kind: input, shape index: {}]
  %s4 = inlined_call_operand.vmem [shape: f32[1,96], index: 4, kind: input, shape index: {}]
  %s5 = inlined_call_operand.vmem [shape: bf16[32,96], index: 5, kind: input, shape index: {}]
  %s6 = inlined_call_operand.vmem [shape: bf16[32,96], index: 6, kind: input, shape index: {}]
  %s7 = inlined_call_operand.vmem [shape: f32[1,96], index: 7, kind: input, shape index: {}]
  %s8 = inlined_call_operand.vmem [shape: f32[1,96], index: 8, kind: input, shape index: {}]
  %s9 = inlined_call_operand.vmem [shape: bf16[32,32], index: 9, kind: input, shape index: {}]
  %s10 = inlined_call_operand.vmem [shape: bf16[32,32], index: 10, kind: input, shape index: {}]
  %s11 = inlined_call_operand.vmem [shape: f32[1,32], index: 11, kind: input, shape index: {}]
  %s12 = inlined_call_operand.vmem [shape: bf16[32,32], index: 12, kind: input, shape index: {}]
  %s13 = inlined_call_operand.vmem [shape: bf16[32,32], index: 13, kind: input, shape index: {}]
  %s14 = inlined_call_operand.vmem [shape: f32[1,32], index: 14, kind: input, shape index: {}]
  %s15 = inlined_call_operand.vmem [shape: f32[7,2,64], index: 15, kind: output, shape index: {0}]
  %s16 = inlined_call_operand.vmem [shape: f32[7,2,32], index: 16, kind: output, shape index: {1}]
  %s17 = inlined_call_operand.vmem [shape: f32[2,32], index: 17, kind: output, shape index: {2}]
  %18 = xla_tuple %s15, %s16, %s17
  %s19 = sld [smem:[#allocation0]]
  $region93: #{_forward.2} parent=0
    _
  %s21 = ssub.s32 1, %s19
  %s22 = scalar_select 0, %s21, %s19
  // Predicated region
  $region2: #{_forward.2} parent=0 // pred_check
    _
  $region3: #{_forward.2} parent=0 // pred_check_branch
    %24 = sbr.rel (0) target = $region5
  $region4: #{_forward.2} parent=0 // pred_region
    _
  $region5: #{_forward.2} parent=0 // pred_fallthru
    _
  // Predicated region
  $region6: #{_forward.2} parent=0 // pred_check
    _
  $region7: #{_forward.2} parent=0 // pred_check_branch
    %26 = sbr.rel (0) target = $region9
  $region8: #{_forward.2} parent=0 // pred_region
    _
  $region9: #{_forward.2} parent=0 // pred_fallthru
    _
  // Predicated region
  $region10: #{_forward.2} parent=0 // pred_check
    _
  $region11: #{_forward.2} parent=0 // pred_check_branch
    %28 = sbr.rel (0) target = $region13
  $region12: #{_forward.2} parent=0 // pred_region
    _
  $region13: #{_forward.2} parent=0 // pred_fallthru
    _
  // Predicated region
  $region14: #{_forward.2} parent=0 // pred_check
    _
  $region15: #{_forward.2} parent=0 // pred_check_branch
    %30 = sbr.rel (0) target = $region17
  $region16: #{_forward.2} parent=0 // pred_region
    _
  $region17: #{_forward.2} parent=0 // pred_fallthru
    _
  // Predicated region
  $region18: #{_forward.2} parent=0 // pred_check
    _
  $region19: #{_forward.2} parent=0 // pred_check_branch
    %32 = sbr.rel (0) target = $region21
  $region20: #{_forward.2} parent=0 // pred_region
    _
  $region21: #{_forward.2} parent=0 // pred_fallthru
    _
  // Predicated region
  $region22: #{_forward.2} parent=0 // pred_check
    _
  $region23: #{_forward.2} parent=0 // pred_check_branch
    %34 = sbr.rel (0) target = $region25
  $region24: #{_forward.2} parent=0 // pred_region
    _
  $region25: #{_forward.2} parent=0 // pred_fallthru
    _
  // Predicated region
  $region26: #{_forward.2} parent=0 // pred_check
    _
  $region27: #{_forward.2} parent=0 // pred_check_branch
    %36 = sbr.rel (0) target = $region29
  $region28: #{_forward.2} parent=0 // pred_region
    _
  $region29: #{_forward.2} parent=0 // pred_fallthru
    _
  // Predicated region
  $region30: #{_forward.2} parent=0 // pred_check
    _
  $region31: #{_forward.2} parent=0 // pred_check_branch
    %38 = sbr.rel (0) target = $region33
  $region32: #{_forward.2} parent=0 // pred_region
    _
  $region33: #{_forward.2} parent=0 // pred_fallthru
    _
  // Predicated region
  $region34: #{_forward.2} parent=0 // pred_check
    _
  $region35: #{_forward.2} parent=0 // pred_check_branch
    %40 = sbr.rel (0) target = $region37
  $region36: #{_forward.2} parent=0 // pred_region
    _
  $region37: #{_forward.2} parent=0 // pred_fallthru
    _
  // Predicated region
  $region38: #{_forward.2} parent=0 // pred_check
    _
  $region39: #{_forward.2} parent=0 // pred_check_branch
    %42 = sbr.rel (0) target = $region41
  $region40: #{_forward.2} parent=0 // pred_region
    _
  $region41: #{_forward.2} parent=0 // pred_fallthru
    _
  // Predicated region
  $region42: #{_forward.2} parent=0 // pred_check
    _
  $region43: #{_forward.2} parent=0 // pred_check_branch
    %44 = sbr.rel (0) target = $region45
  $region44: #{_forward.2} parent=0 // pred_region
    _
  $region45: #{_forward.2} parent=0 // pred_fallthru
    _
  // Predicated region
  $region46: #{_forward.2} parent=0 // pred_check
    _
  $region47: #{_forward.2} parent=0 // pred_check_branch
    %46 = sbr.rel (0) target = $region49
  $region48: #{_forward.2} parent=0 // pred_region
    _
  $region49: #{_forward.2} parent=0 // pred_fallthru
    _
  // Predicated region
  $region50: #{_forward.2} parent=0 // pred_check
    _
  $region51: #{_forward.2} parent=0 // pred_check_branch
    %48 = sbr.rel (0) target = $region53
  $region52: #{_forward.2} parent=0 // pred_region
    _
  $region53: #{_forward.2} parent=0 // pred_fallthru
    _
  // Predicated region
  $region54: #{_forward.2} parent=0 // pred_check
    _
  $region55: #{_forward.2} parent=0 // pred_check_branch
    %50 = sbr.rel (0) target = $region57
  $region56: #{_forward.2} parent=0 // pred_region
    _
  $region57: #{_forward.2} parent=0 // pred_fallthru
    _
  // Predicated region
  $region58: #{_forward.2} parent=0 // pred_check
    _
  $region59: #{_forward.2} parent=0 // pred_check_branch
    %52 = sbr.rel (0) target = $region61
  $region60: #{_forward.2} parent=0 // pred_region
    _
  $region61: #{_forward.2} parent=0 // pred_fallthru
    _
  %v54 = vld [vmem:[%s1] sm:$0xf]
  %v55 = vld [vmem:[%s1 + $0x4] sm:$0xf]
  %v56 = vld [vmem:[%s1 + $0x8] sm:$0xf]
  %v57 = vld [vmem:[%s1 + $0xc] sm:$0xf]
  %v58 = vld [vmem:[%s2] sm:$0xf]
  %v59 = vld [vmem:[%s2 + $0x4] sm:$0xf]
  %v60 = vld [vmem:[%s2 + $0x8] sm:$0xf]
  %v61 = vld [vmem:[%s2 + $0xc] sm:$0xf]
  %v62 = vld [vmem:[%s3] sm:$0x1]
  %v63 = vld [vmem:[%s4] sm:$0x1]
  %v64 = vld [vmem:[%s5] sm:$0xf]
  %v65 = vld [vmem:[%s5 + $0x4] sm:$0xf]
  %v66 = vld [vmem:[%s5 + $0x8] sm:$0xf]
  %v67 = vld [vmem:[%s5 + $0xc] sm:$0xf]
  %v68 = vld [vmem:[%s6] sm:$0xf]
  %v69 = vld [vmem:[%s6 + $0x4] sm:$0xf]
  %v70 = vld [vmem:[%s6 + $0x8] sm:$0xf]
  %v71 = vld [vmem:[%s6 + $0xc] sm:$0xf]
  %v72 = vld [vmem:[%s7] sm:$0x1]
  %v73 = vld [vmem:[%s8] sm:$0x1]
  loop: start=0, step=1, limit=7
  $region62: #{_forward.2} parent=0 // loop_pre_header
    _
  $region63: #{_forward.2} parent=0 // loop_header
    %s75 = sphi 0, %s79
    %p76 = scmp.ge.s32.totalorder %s75, 7
    %v80 = vphi 0.0, %v243
    %v81 = vphi 0.0, %v395
  $region64: #{_forward.2} parent=0 // loop_header_branch
    %78 = sbr.rel (%p76) target = $region68
  $region65: #{_forward.2} parent=0 // loop_body
    %s82 = smul.u32 %s75, 2
    %s83 = scalar_lea.vmem %s0, %s82
    %v84 = vld [vmem:[%s83] sm:$0x3]
    %v85 = vpack.c.bf16 %v84, %v84
    %s86 = ssub.s32 6, %s75
    %s87 = smul.u32 %s86, 2
    %s88 = scalar_lea.vmem %s0, %s87
    %v89 = vld [vmem:[%s88] sm:$0x3]
    %v90 = vpack.c.bf16 %v89, %v89
    %v92 = vlaneseq
    %v93 = vshrl.u32 %v92, 7
    %v94 = vsub.s32 0, %v93
    %v95 = vrot.slane %v62, %v94
    %v101 = vunpack.c.l.b16 %v54
    %v102 = vunpack.c.l.b16 %v55
    %v103 = vunpack.c.l.b16 %v56
    %v104 = vunpack.c.l.b16 %v57
    %v105 = vpack.c.b16 %v102, %v101
    %v106 = vpack.c.b16 %v104, %v103
    %vm109 = vcmask 261120
    %v111 = vsel %vm109, %v85, 0
    %113 = vmatprep.subr.bf16.mxu0 0
    %114 = vmatpush1.bf16.msra.mxu0 0
    %115 = vmatprep.subr.bf16.mxu0 0
    %116 = vmatpush1.bf16.msra.mxu0 0
    %117 = vmatprep.subr.bf16.mxu0 0
    %118 = vmatpush1.bf16.msra.mxu0 0
    %119 = vmatprep.subr.bf16.mxu0 0
    %120 = vmatpush1.bf16.msra.mxu0 0
    %121 = vmatprep.subr.bf16.mxu0 0
    %122 = vmatpush1.bf16.msra.mxu0 0
    %123 = vmatprep.subr.bf16.mxu0 0
    %124 = vmatpush1.bf16.msra.mxu0 0
    %125 = vmatprep.subr.bf16.mxu0 0
    %126 = vmatpush1.bf16.msra.mxu0 %v106
    %127 = vmatprep.subr.bf16.mxu0 0
    %128 = vmatpush1.bf16.msra.mxu0 %v105
    %129 = vmatprep.subr.bf16.mxu0 0
    %130 = vmatpush2.bf16.msra.mxu0 0
    %131 = vmatprep.subr.bf16.mxu0 0
    %132 = vmatpush2.bf16.msra.mxu0 0
    %133 = vmatprep.subr.bf16.mxu0 0
    %134 = vmatpush2.bf16.msra.mxu0 0
    %135 = vmatprep.subr.bf16.mxu0 0
    %136 = vmatpush2.bf16.msra.mxu0 0
    %137 = vmatprep.subr.bf16.mxu0 0
    %138 = vmatpush2.bf16.msra.mxu0 0
    %139 = vmatprep.subr.bf16.mxu0 0
    %140 = vmatpush2.bf16.msra.mxu0 0
    %141 = vmatprep.subr.bf16.mxu0 0
    %142 = vmatpush2.bf16.msra.mxu0 0
    %143 = vmatprep.subr.bf16.mxu0 0
    %144 = vmatpush2.bf16.msra.mxu0 0
    %145 = vmatprep.mubr.bf16.mxu0 0
    %146 = vmatmul.mubr.bf16.gmra.mxu0 %v111
    %v147 = vpop.f32.mrf.mxu0
    %v148 = vadd.f32 %v95, %v147
    %v149 = vpop.f32.mrf.mxu0
    %v150 = vpop.f32.mrf.mxu0
    %v151 = vpop.f32.mrf.mxu0
    %152 = vdwg.mxu0
    %v153 = vpack.c.bf16 %v80, %v80
    %v155 = vlaneseq
    %v156 = vshrl.u32 %v155, 7
    %v157 = vsub.s32 0, %v156
    %v158 = vrot.slane %v63, %v157
    %161 = vrot.lane.b32.xlu0 %v153, 96
    %v162 = vpop.permute.xlu0 %161
    %v167 = vunpack.c.l.b16 %v58
    %v168 = vunpack.c.l.b16 %v59
    %v169 = vunpack.c.l.b16 %v60
    %v170 = vunpack.c.l.b16 %v61
    %v171 = vpack.c.b16 %v168, %v167
    %v172 = vpack.c.b16 %v170, %v169
    %v176 = vsel %vm109, %v162, 0
    %178 = vmatprep.subr.bf16.mxu0 0
    %179 = vmatpush1.bf16.msra.mxu0 0
    %180 = vmatprep.subr.bf16.mxu0 0
    %181 = vmatpush1.bf16.msra.mxu0 0
    %182 = vmatprep.subr.bf16.mxu0 0
    %183 = vmatpush1.bf16.msra.mxu0 0
    %184 = vmatprep.subr.bf16.mxu0 0
    %185 = vmatpush1.bf16.msra.mxu0 0
    %186 = vmatprep.subr.bf16.mxu0 0
    %187 = vmatpush1.bf16.msra.mxu0 0
    %188 = vmatprep.subr.bf16.mxu0 0
    %189 = vmatpush1.bf16.msra.mxu0 0
    %190 = vmatprep.subr.bf16.mxu0 0
    %191 = vmatpush1.bf16.msra.mxu0 %v172
    %192 = vmatprep.subr.bf16.mxu0 0
    %193 = vmatpush1.bf16.msra.mxu0 %v171
    %194 = vmatprep.subr.bf16.mxu0 0
    %195 = vmatpush2.bf16.msra.mxu0 0
    %196 = vmatprep.subr.bf16.mxu0 0
    %197 = vmatpush2.bf16.msra.mxu0 0
    %198 = vmatprep.subr.bf16.mxu0 0
    %199 = vmatpush2.bf16.msra.mxu0 0
    %200 = vmatprep.subr.bf16.mxu0 0
    %201 = vmatpush2.bf16.msra.mxu0 0
    %202 = vmatprep.subr.bf16.mxu0 0
    %203 = vmatpush2.bf16.msra.mxu0 0
    %204 = vmatprep.subr.bf16.mxu0 0
    %205 = vmatpush2.bf16.msra.mxu0 0
    %206 = vmatprep.subr.bf16.mxu0 0
    %207 = vmatpush2.bf16.msra.mxu0 0
    %208 = vmatprep.subr.bf16.mxu0 0
    %209 = vmatpush2.bf16.msra.mxu0 0
    %210 = vmatprep.mubr.bf16.mxu0 0
    %211 = vmatmul.mubr.bf16.gmra.mxu0 %v176
    %v212 = vpop.f32.mrf.mxu0
    %v213 = vadd.f32 %v158, %v212
    %v214 = vpop.f32.mrf.mxu0
    %v215 = vpop.f32.mrf.mxu0
    %v216 = vpop.f32.mrf.mxu0
    %217 = vdwg.mxu0
    %v218 = vadd.f32 %v148, %v213
    %v219 = vxor.u32 %v218, 2147483648
    %v220 = vmul.f32 %v219, 1.442695
    %v221 = vpow.pop %v220
    %v222 = vadd.f32 %v221, 1.0
    %v223 = vrcp.pop %v222
    %v224 = vmul.f32 1.0, %v223
    %226 = vrot.lane.b32.xlu0 %v213, 64
    %v227 = vpop.permute.xlu0 %226
    %v229 = vmul.f32 %v224, %v227
    %231 = vrot.lane.b32.xlu0 %v229, 64
    %v232 = vpop.permute.xlu0 %231
    %v234 = vadd.f32 %v148, %v232
    %v235 = vtanh.pop %v234
    %v236 = vsub.f32 1.0, %v224
    %238 = vrot.lane.b32.xlu0 %v235, 96
    %v239 = vpop.permute.xlu0 %238
    %v241 = vmul.f32 %v236, %v239
    %v242 = vmul.f32 %v224, %v80
    %v243 = vadd.f32 %v241, %v242
    %v245 = vlaneseq
    %v246 = vshrl.u32 %v245, 7
    %v247 = vsub.s32 0, %v246
    %v248 = vrot.slane %v72, %v247
    %v254 = vunpack.c.l.b16 %v64
    %v255 = vunpack.c.l.b16 %v65
    %v256 = vunpack.c.l.b16 %v66
    %v257 = vunpack.c.l.b16 %v67
    %v258 = vpack.c.b16 %v255, %v254
    %v259 = vpack.c.b16 %v257, %v256
    %v263 = vsel %vm109, %v90, 0
    %265 = vmatprep.subr.bf16.mxu0 0
    %266 = vmatpush1.bf16.msra.mxu0 0
    %267 = vmatprep.subr.bf16.mxu0 0
    %268 = vmatpush1.bf16.msra.mxu0 0
    %269 = vmatprep.subr.bf16.mxu0 0
    %270 = vmatpush1.bf16.msra.mxu0 0
    %271 = vmatprep.subr.bf16.mxu0 0
    %272 = vmatpush1.bf16.msra.mxu0 0
    %273 = vmatprep.subr.bf16.mxu0 0
    %274 = vmatpush1.bf16.msra.mxu0 0
    %275 = vmatprep.subr.bf16.mxu0 0
    %276 = vmatpush1.bf16.msra.mxu0 0
    %277 = vmatprep.subr.bf16.mxu0 0
    %278 = vmatpush1.bf16.msra.mxu0 %v259
    %279 = vmatprep.subr.bf16.mxu0 0
    %280 = vmatpush1.bf16.msra.mxu0 %v258
    %281 = vmatprep.subr.bf16.mxu0 0
    %282 = vmatpush2.bf16.msra.mxu0 0
    %283 = vmatprep.subr.bf16.mxu0 0
    %284 = vmatpush2.bf16.msra.mxu0 0
    %285 = vmatprep.subr.bf16.mxu0 0
    %286 = vmatpush2.bf16.msra.mxu0 0
    %287 = vmatprep.subr.bf16.mxu0 0
    %288 = vmatpush2.bf16.msra.mxu0 0
    %289 = vmatprep.subr.bf16.mxu0 0
    %290 = vmatpush2.bf16.msra.mxu0 0
    %291 = vmatprep.subr.bf16.mxu0 0
    %292 = vmatpush2.bf16.msra.mxu0 0
    %293 = vmatprep.subr.bf16.mxu0 0
    %294 = vmatpush2.bf16.msra.mxu0 0
    %295 = vmatprep.subr.bf16.mxu0 0
    %296 = vmatpush2.bf16.msra.mxu0 0
    %297 = vmatprep.mubr.bf16.mxu0 0
    %298 = vmatmul.mubr.bf16.gmra.mxu0 %v263
    %v299 = vpop.f32.mrf.mxu0
    %v300 = vadd.f32 %v248, %v299
    %v301 = vpop.f32.mrf.mxu0
    %v302 = vpop.f32.mrf.mxu0
    %v303 = vpop.f32.mrf.mxu0
    %304 = vdwg.mxu0
    %v305 = vpack.c.bf16 %v81, %v81
    %v307 = vlaneseq
    %v308 = vshrl.u32 %v307, 7
    %v309 = vsub.s32 0, %v308
    %v310 = vrot.slane %v73, %v309
    %313 = vrot.lane.b32.xlu0 %v305, 96
    %v314 = vpop.permute.xlu0 %313
    %v319 = vunpack.c.l.b16 %v68
    %v320 = vunpack.c.l.b16 %v69
    %v321 = vunpack.c.l.b16 %v70
    %v322 = vunpack.c.l.b16 %v71
    %v323 = vpack.c.b16 %v320, %v319
    %v324 = vpack.c.b16 %v322, %v321
    %v328 = vsel %vm109, %v314, 0
    %330 = vmatprep.subr.bf16.mxu0 0
    %331 = vmatpush1.bf16.msra.mxu0 0
    %332 = vmatprep.subr.bf16.mxu0 0
    %333 = vmatpush1.bf16.msra.mxu0 0
    %334 = vmatprep.subr.bf16.mxu0 0
    %335 = vmatpush1.bf16.msra.mxu0 0
    %336 = vmatprep.subr.bf16.mxu0 0
    %337 = vmatpush1.bf16.msra.mxu0 0
    %338 = vmatprep.subr.bf16.mxu0 0
    %339 = vmatpush1.bf16.msra.mxu0 0
    %340 = vmatprep.subr.bf16.mxu0 0
    %341 = vmatpush1.bf16.msra.mxu0 0
    %342 = vmatprep.subr.bf16.mxu0 0
    %343 = vmatpush1.bf16.msra.mxu0 %v324
    %344 = vmatprep.subr.bf16.mxu0 0
    %345 = vmatpush1.bf16.msra.mxu0 %v323
    %346 = vmatprep.subr.bf16.mxu0 0
    %347 = vmatpush2.bf16.msra.mxu0 0
    %348 = vmatprep.subr.bf16.mxu0 0
    %349 = vmatpush2.bf16.msra.mxu0 0
    %350 = vmatprep.subr.bf16.mxu0 0
    %351 = vmatpush2.bf16.msra.mxu0 0
    %352 = vmatprep.subr.bf16.mxu0 0
    %353 = vmatpush2.bf16.msra.mxu0 0
    %354 = vmatprep.subr.bf16.mxu0 0
    %355 = vmatpush2.bf16.msra.mxu0 0
    %356 = vmatprep.subr.bf16.mxu0 0
    %357 = vmatpush2.bf16.msra.mxu0 0
    %358 = vmatprep.subr.bf16.mxu0 0
    %359 = vmatpush2.bf16.msra.mxu0 0
    %360 = vmatprep.subr.bf16.mxu0 0
    %361 = vmatpush2.bf16.msra.mxu0 0
    %362 = vmatprep.mubr.bf16.mxu0 0
    %363 = vmatmul.mubr.bf16.gmra.mxu0 %v328
    %v364 = vpop.f32.mrf.mxu0
    %v365 = vadd.f32 %v310, %v364
    %v366 = vpop.f32.mrf.mxu0
    %v367 = vpop.f32.mrf.mxu0
    %v368 = vpop.f32.mrf.mxu0
    %369 = vdwg.mxu0
    %v370 = vadd.f32 %v300, %v365
    %v371 = vxor.u32 %v370, 2147483648
    %v372 = vmul.f32 %v371, 1.442695
    %v373 = vpow.pop %v372
    %v374 = vadd.f32 %v373, 1.0
    %v375 = vrcp.pop %v374
    %v376 = vmul.f32 1.0, %v375
    %378 = vrot.lane.b32.xlu0 %v365, 64
    %v379 = vpop.permute.xlu0 %378
    %v381 = vmul.f32 %v376, %v379
    %383 = vrot.lane.b32.xlu0 %v381, 64
    %v384 = vpop.permute.xlu0 %383
    %v386 = vadd.f32 %v300, %v384
    %v387 = vtanh.pop %v386
    %v388 = vsub.f32 1.0, %v376
    %390 = vrot.lane.b32.xlu0 %v387, 96
    %v391 = vpop.permute.xlu0 %390
    %v393 = vmul.f32 %v388, %v391
    %v394 = vmul.f32 %v376, %v81
    %v395 = vadd.f32 %v393, %v394
    %397 = vrot.lane.b32.xlu0 %v243, 96
    %v398 = vpop.permute.xlu0 %397
    %s400 = scalar_lea.vmem [#allocation2], %s82
    %vm401 = vcmask 254976
    %402 = vst.msk [vmem:[%s400] sm:$0x3] %vm401, %v398
    %404 = vrot.lane.b32.xlu0 %v395, 96
    %v405 = vpop.permute.xlu0 %404
    %s407 = scalar_lea.vmem [#allocation3], %s87
    %408 = vst.msk [vmem:[%s407] sm:$0x3] %vm401, %v405
  $region66: #{_forward.2} parent=0 // loop_footer
    %s79 = sadd.s32 1, %s75
  $region67: #{_forward.2} parent=0 // loop_footer_branch
    %74 = sbr.rel target = $region63
  $region68: #{_forward.2} parent=0 // loop_exit
    _
  %v409 = vpack.c.bf16 %v80, %v80
  %v410 = vld [vmem:[%s9] sm:$0xf]
  %v411 = vld [vmem:[%s9 + $0x4] sm:$0xf]
  %v412 = vld [vmem:[%s9 + $0x8] sm:$0xf]
  %v413 = vld [vmem:[%s9 + $0xc] sm:$0xf]
  %v414 = vpack.c.bf16 %v81, %v81
  %v415 = vld [vmem:[%s10] sm:$0xf]
  %v416 = vld [vmem:[%s10 + $0x4] sm:$0xf]
  %v417 = vld [vmem:[%s10 + $0x8] sm:$0xf]
  %v418 = vld [vmem:[%s10 + $0xc] sm:$0xf]
  %420 = vrot.lane.b32.xlu0 %v414, 96
  %v421 = vpop.permute.xlu0 %420
  %v426 = vunpack.c.l.b16 %v415
  %v427 = vunpack.c.l.b16 %v416
  %v428 = vunpack.c.l.b16 %v417
  %v429 = vunpack.c.l.b16 %v418
  %v430 = vpack.c.b16 %v427, %v426
  %v431 = vpack.c.b16 %v429, %v428
  %vm434 = vcmask 261120
  %v436 = vsel %vm434, %v421, 0
  %438 = vmatprep.subr.bf16.mxu0 0
  %439 = vmatpush1.bf16.msra.mxu0 0
  %440 = vmatprep.subr.bf16.mxu0 0
  %441 = vmatpush1.bf16.msra.mxu0 0
  %442 = vmatprep.subr.bf16.mxu0 0
  %443 = vmatpush1.bf16.msra.mxu0 0
  %444 = vmatprep.subr.bf16.mxu0 0
  %445 = vmatpush1.bf16.msra.mxu0 0
  %446 = vmatprep.subr.bf16.mxu0 0
  %447 = vmatpush1.bf16.msra.mxu0 0
  %448 = vmatprep.subr.bf16.mxu0 0
  %449 = vmatpush1.bf16.msra.mxu0 0
  %450 = vmatprep.subr.bf16.mxu0 0
  %451 = vmatpush1.bf16.msra.mxu0 %v431
  %452 = vmatprep.subr.bf16.mxu0 0
  %453 = vmatpush1.bf16.msra.mxu0 %v430
  %454 = vmatprep.subr.bf16.mxu0 0
  %455 = vmatpush2.bf16.msra.mxu0 0
  %456 = vmatprep.subr.bf16.mxu0 0
  %457 = vmatpush2.bf16.msra.mxu0 0
  %458 = vmatprep.subr.bf16.mxu0 0
  %459 = vmatpush2.bf16.msra.mxu0 0
  %460 = vmatprep.subr.bf16.mxu0 0
  %461 = vmatpush2.bf16.msra.mxu0 0
  %462 = vmatprep.subr.bf16.mxu0 0
  %463 = vmatpush2.bf16.msra.mxu0 0
  %464 = vmatprep.subr.bf16.mxu0 0
  %465 = vmatpush2.bf16.msra.mxu0 0
  %466 = vmatprep.subr.bf16.mxu0 0
  %467 = vmatpush2.bf16.msra.mxu0 0
  %468 = vmatprep.subr.bf16.mxu0 0
  %469 = vmatpush2.bf16.msra.mxu0 0
  %470 = vmatprep.mubr.bf16.mxu0 0
  %471 = vmatmul.mubr.bf16.gmra.mxu0 %v436
  %v472 = vpop.f32.mrf.mxu0
  %v473 = vadd.f32 0.0, %v472
  %v474 = vpop.f32.mrf.mxu0
  %v475 = vpop.f32.mrf.mxu0
  %v476 = vpop.f32.mrf.mxu0
  %477 = vdwg.mxu0
  %479 = vrot.lane.b32.xlu0 %v409, 96
  %v480 = vpop.permute.xlu0 %479
  %v485 = vunpack.c.l.b16 %v410
  %v486 = vunpack.c.l.b16 %v411
  %v487 = vunpack.c.l.b16 %v412
  %v488 = vunpack.c.l.b16 %v413
  %v489 = vpack.c.b16 %v486, %v485
  %v490 = vpack.c.b16 %v488, %v487
  %v494 = vsel %vm434, %v480, 0
  %496 = vmatprep.subr.bf16.mxu0 0
  %497 = vmatpush1.bf16.msra.mxu0 0
  %498 = vmatprep.subr.bf16.mxu0 0
  %499 = vmatpush1.bf16.msra.mxu0 0
  %500 = vmatprep.subr.bf16.mxu0 0
  %501 = vmatpush1.bf16.msra.mxu0 0
  %502 = vmatprep.subr.bf16.mxu0 0
  %503 = vmatpush1.bf16.msra.mxu0 0
  %504 = vmatprep.subr.bf16.mxu0 0
  %505 = vmatpush1.bf16.msra.mxu0 0
  %506 = vmatprep.subr.bf16.mxu0 0
  %507 = vmatpush1.bf16.msra.mxu0 0
  %508 = vmatprep.subr.bf16.mxu0 0
  %509 = vmatpush1.bf16.msra.mxu0 %v490
  %510 = vmatprep.subr.bf16.mxu0 0
  %511 = vmatpush1.bf16.msra.mxu0 %v489
  %512 = vmatprep.subr.bf16.mxu0 0
  %513 = vmatpush2.bf16.msra.mxu0 0
  %514 = vmatprep.subr.bf16.mxu0 0
  %515 = vmatpush2.bf16.msra.mxu0 0
  %516 = vmatprep.subr.bf16.mxu0 0
  %517 = vmatpush2.bf16.msra.mxu0 0
  %518 = vmatprep.subr.bf16.mxu0 0
  %519 = vmatpush2.bf16.msra.mxu0 0
  %520 = vmatprep.subr.bf16.mxu0 0
  %521 = vmatpush2.bf16.msra.mxu0 0
  %522 = vmatprep.subr.bf16.mxu0 0
  %523 = vmatpush2.bf16.msra.mxu0 0
  %524 = vmatprep.subr.bf16.mxu0 0
  %525 = vmatpush2.bf16.msra.mxu0 0
  %526 = vmatprep.subr.bf16.mxu0 0
  %527 = vmatpush2.bf16.msra.mxu0 0
  %528 = vmatprep.mubr.bf16.mxu0 0
  %529 = vmatmul.mubr.bf16.gmra.mxu0 %v494
  %v530 = vpop.f32.mrf.mxu0
  %v531 = vadd.f32 %v473, %v530
  %v532 = vpop.f32.mrf.mxu0
  %v533 = vpop.f32.mrf.mxu0
  %v534 = vpop.f32.mrf.mxu0
  %535 = vdwg.mxu0
  %v536 = vld [vmem:[%s11] sm:$0x1]
  %v538 = vlaneseq
  %v539 = vshrl.u32 %v538, 7
  %v540 = vsub.s32 0, %v539
  %v541 = vrot.slane %v536, %v540
  %v543 = vadd.f32 %v531, %v541
  %v544 = vtanh.pop %v543
  %vm545 = vcmask 254976
  %546 = vst.msk [vmem:[%s17] sm:$0x3] %vm545, %v544
  %v547 = vld [vmem:[#allocation2] sm:$0x3]
  %v548 = vld [vmem:[#allocation2 + $0x2] sm:$0x3]
  %v549 = vld [vmem:[#allocation2 + $0x4] sm:$0x3]
  %v550 = vld [vmem:[#allocation2 + $0x6] sm:$0x3]
  %v551 = vld [vmem:[#allocation2 + $0x8] sm:$0x3]
  %v552 = vld [vmem:[#allocation2 + $0xa] sm:$0x3]
  %v553 = vld [vmem:[#allocation2 + $0xc] sm:$0x3]
  %v554 = vld [vmem:[#allocation3] sm:$0x3]
  %v555 = vld [vmem:[#allocation3 + $0x2] sm:$0x3]
  %v556 = vld [vmem:[#allocation3 + $0x4] sm:$0x3]
  %v557 = vld [vmem:[#allocation3 + $0x6] sm:$0x3]
  %v558 = vld [vmem:[#allocation3 + $0x8] sm:$0x3]
  %v559 = vld [vmem:[#allocation3 + $0xa] sm:$0x3]
  %v560 = vld [vmem:[#allocation3 + $0xc] sm:$0x3]
  %561 = vst.msk [vmem:[%s15] sm:$0x3] %vm545, %v547
  %562 = vst.msk [vmem:[%s15 + $0x2] sm:$0x3] %vm545, %v548
  %563 = vst.msk [vmem:[%s15 + $0x4] sm:$0x3] %vm545, %v549
  %564 = vst.msk [vmem:[%s15 + $0x6] sm:$0x3] %vm545, %v550
  %565 = vst.msk [vmem:[%s15 + $0x8] sm:$0x3] %vm545, %v551
  %566 = vst.msk [vmem:[%s15 + $0xa] sm:$0x3] %vm545, %v552
  %567 = vst.msk [vmem:[%s15 + $0xc] sm:$0x3] %vm545, %v553
  %575 = vrot.lane.b32.xlu0 %v554, 32
  %v576 = vpop.permute.xlu0 %575
  %577 = vrot.lane.b32.xlu0 %v555, 32
  %v578 = vpop.permute.xlu0 %577
  %579 = vrot.lane.b32.xlu0 %v556, 32
  %v580 = vpop.permute.xlu0 %579
  %581 = vrot.lane.b32.xlu0 %v557, 32
  %v582 = vpop.permute.xlu0 %581
  %583 = vrot.lane.b32.xlu0 %v558, 32
  %v584 = vpop.permute.xlu0 %583
  %585 = vrot.lane.b32.xlu0 %v559, 32
  %v586 = vpop.permute.xlu0 %585
  %587 = vrot.lane.b32.xlu0 %v560, 32
  %v588 = vpop.permute.xlu0 %587
  %vm596 = vcmask 517376
  %597 = vst.msk [vmem:[%s15] sm:$0x3] %vm596, %v576
  %598 = vst.msk [vmem:[%s15 + $0x2] sm:$0x3] %vm596, %v578
  %599 = vst.msk [vmem:[%s15 + $0x4] sm:$0x3] %vm596, %v580
  %600 = vst.msk [vmem:[%s15 + $0x6] sm:$0x3] %vm596, %v582
  %601 = vst.msk [vmem:[%s15 + $0x8] sm:$0x3] %vm596, %v584
  %602 = vst.msk [vmem:[%s15 + $0xa] sm:$0x3] %vm596, %v586
  %603 = vst.msk [vmem:[%s15 + $0xc] sm:$0x3] %vm596, %v588
  %v611 = vcombine.low %v547, %v548
  %v612 = vcombine.low %v549, %v550
  %v614 = vunpack.c.l.s4 1983009808
  %v615 = vunpack.c.0.s8 %v614
  %v616 = vlaneseq
  %v617 = vshrl.u32 %v616, 7
  %v618 = vsub.s32 %v615, %v617
  %v619 = vrot.slane %v611, %v618
  %v621 = vunpack.c.l.s4 1983009808
  %v622 = vunpack.c.0.s8 %v621
  %v623 = vlaneseq
  %v624 = vshrl.u32 %v623, 7
  %v625 = vsub.s32 %v622, %v624
  %v626 = vrot.slane %v612, %v625
  %v627 = vcombine.low %v619, %v626
  %v628 = vcombine.low %v551, %v552
  %v630 = vunpack.c.l.s4 1983009808
  %v631 = vunpack.c.0.s8 %v630
  %v632 = vlaneseq
  %v633 = vshrl.u32 %v632, 7
  %v634 = vsub.s32 %v631, %v633
  %v635 = vrot.slane %v628, %v634
  %v637 = vunpack.c.l.s4 1983009808
  %v638 = vunpack.c.0.s8 %v637
  %v639 = vlaneseq
  %v640 = vshrl.u32 %v639, 7
  %v641 = vsub.s32 %v638, %v640
  %v642 = vrot.slane %v553, %v641
  %v643 = vcombine.low %v635, %v642
  %v646 = vpack.c.bf16 %v643, %v627
  %v647 = vcombine.low %v554, %v555
  %v648 = vcombine.low %v556, %v557
  %v650 = vunpack.c.l.s4 1983009808
  %v651 = vunpack.c.0.s8 %v650
  %v652 = vlaneseq
  %v653 = vshrl.u32 %v652, 7
  %v654 = vsub.s32 %v651, %v653
  %v655 = vrot.slane %v647, %v654
  %v657 = vunpack.c.l.s4 1983009808
  %v658 = vunpack.c.0.s8 %v657
  %v659 = vlaneseq
  %v660 = vshrl.u32 %v659, 7
  %v661 = vsub.s32 %v658, %v660
  %v662 = vrot.slane %v648, %v661
  %v663 = vcombine.low %v655, %v662
  %v664 = vcombine.low %v558, %v559
  %v666 = vunpack.c.l.s4 1983009808
  %v667 = vunpack.c.0.s8 %v666
  %v668 = vlaneseq
  %v669 = vshrl.u32 %v668, 7
  %v670 = vsub.s32 %v667, %v669
  %v671 = vrot.slane %v664, %v670
  %v673 = vunpack.c.l.s4 1983009808
  %v674 = vunpack.c.0.s8 %v673
  %v675 = vlaneseq
  %v676 = vshrl.u32 %v675, 7
  %v677 = vsub.s32 %v674, %v676
  %v678 = vrot.slane %v560, %v677
  %v679 = vcombine.low %v671, %v678
  %v682 = vpack.c.bf16 %v679, %v663
  %v683 = vld [vmem:[%s12] sm:$0xf]
  %v684 = vld [vmem:[%s12 + $0x4] sm:$0xf]
  %v685 = vld [vmem:[%s12 + $0x8] sm:$0xf]
  %v686 = vld [vmem:[%s12 + $0xc] sm:$0xf]
  %v687 = vld [vmem:[%s13] sm:$0xf]
  %v688 = vld [vmem:[%s13 + $0x4] sm:$0xf]
  %v689 = vld [vmem:[%s13 + $0x8] sm:$0xf]
  %v690 = vld [vmem:[%s13 + $0xc] sm:$0xf]
  %v695 = vunpack.c.l.b16 %v687
  %v696 = vunpack.c.l.b16 %v688
  %v697 = vunpack.c.l.b16 %v689
  %v698 = vunpack.c.l.b16 %v690
  %v699 = vpack.c.b16 %v696, %v695
  %v700 = vpack.c.b16 %v698, %v697
  %v704 = vsel %vm434, %v682, 0
  %706 = vmatprep.subr.bf16.mxu0 0
  %707 = vmatpush1.bf16.msra.mxu0 0
  %708 = vmatprep.subr.bf16.mxu0 0
  %709 = vmatpush1.bf16.msra.mxu0 0
  %710 = vmatprep.subr.bf16.mxu0 0
  %711 = vmatpush1.bf16.msra.mxu0 0
  %712 = vmatprep.subr.bf16.mxu0 0
  %713 = vmatpush1.bf16.msra.mxu0 0
  %714 = vmatprep.subr.bf16.mxu0 0
  %715 = vmatpush1.bf16.msra.mxu0 0
  %716 = vmatprep.subr.bf16.mxu0 0
  %717 = vmatpush1.bf16.msra.mxu0 0
  %718 = vmatprep.subr.bf16.mxu0 0
  %719 = vmatpush1.bf16.msra.mxu0 %v700
  %720 = vmatprep.subr.bf16.mxu0 0
  %721 = vmatpush1.bf16.msra.mxu0 %v699
  %722 = vmatprep.subr.bf16.mxu0 0
  %723 = vmatpush2.bf16.msra.mxu0 0
  %724 = vmatprep.subr.bf16.mxu0 0
  %725 = vmatpush2.bf16.msra.mxu0 0
  %726 = vmatprep.subr.bf16.mxu0 0
  %727 = vmatpush2.bf16.msra.mxu0 0
  %728 = vmatprep.subr.bf16.mxu0 0
  %729 = vmatpush2.bf16.msra.mxu0 0
  %730 = vmatprep.subr.bf16.mxu0 0
  %731 = vmatpush2.bf16.msra.mxu0 0
  %732 = vmatprep.subr.bf16.mxu0 0
  %733 = vmatpush2.bf16.msra.mxu0 0
  %734 = vmatprep.subr.bf16.mxu0 0
  %735 = vmatpush2.bf16.msra.mxu0 0
  %736 = vmatprep.subr.bf16.mxu0 0
  %737 = vmatpush2.bf16.msra.mxu0 0
  %738 = vmatprep.mubr.bf16.mxu0 0
  %739 = vmatmul.mubr.bf16.gmra.mxu0 %v704
  %v740 = vpop.f32.mrf.mxu0
  %v741 = vadd.f32 0.0, %v740
  %v742 = vpop.f32.mrf.mxu0
  %v743 = vpop.f32.mrf.mxu0
  %v744 = vadd.f32 0.0, %v743
  %v745 = vpop.f32.mrf.mxu0
  %746 = vdwg.mxu0
  %v751 = vunpack.c.l.b16 %v683
  %v752 = vunpack.c.l.b16 %v684
  %v753 = vunpack.c.l.b16 %v685
  %v754 = vunpack.c.l.b16 %v686
  %v755 = vpack.c.b16 %v752, %v751
  %v756 = vpack.c.b16 %v754, %v753
  %v760 = vsel %vm434, %v646, 0
  %762 = vmatprep.subr.bf16.mxu0 0
  %763 = vmatpush1.bf16.msra.mxu0 0
  %764 = vmatprep.subr.bf16.mxu0 0
  %765 = vmatpush1.bf16.msra.mxu0 0
  %766 = vmatprep.subr.bf16.mxu0 0
  %767 = vmatpush1.bf16.msra.mxu0 0
  %768 = vmatprep.subr.bf16.mxu0 0
  %769 = vmatpush1.bf16.msra.mxu0 0
  %770 = vmatprep.subr.bf16.mxu0 0
  %771 = vmatpush1.bf16.msra.mxu0 0
  %772 = vmatprep.subr.bf16.mxu0 0
  %773 = vmatpush1.bf16.msra.mxu0 0
  %774 = vmatprep.subr.bf16.mxu0 0
  %775 = vmatpush1.bf16.msra.mxu0 %v756
  %776 = vmatprep.subr.bf16.mxu0 0
  %777 = vmatpush1.bf16.msra.mxu0 %v755
  %778 = vmatprep.subr.bf16.mxu0 0
  %779 = vmatpush2.bf16.msra.mxu0 0
  %780 = vmatprep.subr.bf16.mxu0 0
  %781 = vmatpush2.bf16.msra.mxu0 0
  %782 = vmatprep.subr.bf16.mxu0 0
  %783 = vmatpush2.bf16.msra.mxu0 0
  %784 = vmatprep.subr.bf16.mxu0 0
  %785 = vmatpush2.bf16.msra.mxu0 0
  %786 = vmatprep.subr.bf16.mxu0 0
  %787 = vmatpush2.bf16.msra.mxu0 0
  %788 = vmatprep.subr.bf16.mxu0 0
  %789 = vmatpush2.bf16.msra.mxu0 0
  %790 = vmatprep.subr.bf16.mxu0 0
  %791 = vmatpush2.bf16.msra.mxu0 0
  %792 = vmatprep.subr.bf16.mxu0 0
  %793 = vmatpush2.bf16.msra.mxu0 0
  %794 = vmatprep.mubr.bf16.mxu0 0
  %795 = vmatmul.mubr.bf16.gmra.mxu0 %v760
  %v796 = vpop.f32.mrf.mxu0
  %v797 = vadd.f32 %v741, %v796
  %v798 = vpop.f32.mrf.mxu0
  %v799 = vpop.f32.mrf.mxu0
  %v800 = vadd.f32 %v744, %v799
  %v801 = vpop.f32.mrf.mxu0
  %802 = vdwg.mxu0
  %v803 = vld [vmem:[%s14] sm:$0x1]
  %v805 = vlaneseq
  %v806 = vshrl.u32 %v805, 7
  %v807 = vsub.s32 0, %v806
  %v808 = vrot.slane %v803, %v807
  %v810 = vadd.f32 %v797, %v808
  %v811 = vadd.f32 %v800, %v808
  %v814 = vcombine.high %v810, %v810
  %v816 = vunpack.c.l.s4 1983009808
  %v817 = vunpack.c.0.s8 %v816
  %v818 = vlaneseq
  %v819 = vshrl.u32 %v818, 7
  %v820 = vsub.s32 %v817, %v819
  %v821 = vrot.slane %v810, %v820
  %v823 = vunpack.c.l.s4 1983009808
  %v824 = vunpack.c.0.s8 %v823
  %v825 = vlaneseq
  %v826 = vshrl.u32 %v825, 7
  %v827 = vsub.s32 %v824, %v826
  %v828 = vrot.slane %v814, %v827
  %v829 = vcombine.high %v821, %v821
  %v830 = vcombine.high %v828, %v828
  %v831 = vcombine.high %v811, %v811
  %v833 = vunpack.c.l.s4 1983009808
  %v834 = vunpack.c.0.s8 %v833
  %v835 = vlaneseq
  %v836 = vshrl.u32 %v835, 7
  %v837 = vsub.s32 %v834, %v836
  %v838 = vrot.slane %v811, %v837
  %v840 = vunpack.c.l.s4 1983009808
  %v841 = vunpack.c.0.s8 %v840
  %v842 = vlaneseq
  %v843 = vshrl.u32 %v842, 7
  %v844 = vsub.s32 %v841, %v843
  %v845 = vrot.slane %v831, %v844
  %v846 = vcombine.high %v838, %v838
  %854 = vst.msk [vmem:[%s16] sm:$0x3] %vm545, %v821
  %855 = vst.msk [vmem:[%s16 + $0x2] sm:$0x3] %vm545, %v829
  %856 = vst.msk [vmem:[%s16 + $0x4] sm:$0x3] %vm545, %v828
  %857 = vst.msk [vmem:[%s16 + $0x6] sm:$0x3] %vm545, %v830
  %858 = vst.msk [vmem:[%s16 + $0x8] sm:$0x3] %vm545, %v838
  %859 = vst.msk [vmem:[%s16 + $0xa] sm:$0x3] %vm545, %v846
  %860 = vst.msk [vmem:[%s16 + $0xc] sm:$0x3] %vm545, %v845
  // Predicated region
  $region69: #{_forward.2} parent=0 // pred_check
    _
  $region70: #{_forward.2} parent=0 // pred_check_branch
    %862 = sbr.rel (0) target = $region72
  $region71: #{_forward.2} parent=0 // pred_region
    _
  $region72: #{_forward.2} parent=0 // pred_fallthru
    _
  // Predicated region
  $region73: #{_forward.2} parent=0 // pred_check
    _
  $region74: #{_forward.2} parent=0 // pred_check_branch
    %864 = sbr.rel (0) target = $region76
  $region75: #{_forward.2} parent=0 // pred_region
    _
  $region76: #{_forward.2} parent=0 // pred_fallthru
    _
  // Predicated region
  $region77: #{_forward.2} parent=0 // pred_check
    _
  $region78: #{_forward.2} parent=0 // pred_check_branch
    %866 = sbr.rel (0) target = $region80
  $region79: #{_forward.2} parent=0 // pred_region
    _
  $region80: #{_forward.2} parent=0 // pred_fallthru
    _
  // Predicated region
  $region81: #{_forward.2} parent=0 // pred_check
    _
  $region82: #{_forward.2} parent=0 // pred_check_branch
    %868 = sbr.rel (0) target = $region84
  $region83: #{_forward.2} parent=0 // pred_region
    _
  $region84: #{_forward.2} parent=0 // pred_fallthru
    _
  // Predicated region
  $region85: #{_forward.2} parent=0 // pred_check
    _
  $region86: #{_forward.2} parent=0 // pred_check_branch
    %870 = sbr.rel (0) target = $region88
  $region87: #{_forward.2} parent=0 // pred_region
    _
  $region88: #{_forward.2} parent=0 // pred_fallthru
    _
  // Predicated region
  $region89: #{_forward.2} parent=0 // pred_check
    _
  $region90: #{_forward.2} parent=0 // pred_check_branch
    %872 = sbr.rel (0) target = $region92
  $region91: #{_forward.2} parent=0 // pred_region
    _
  $region92: #{_forward.2} parent=0 // pred_fallthru
    _

// kernel: _forward.3
$region0: #{_forward.3}
  #allocation0 [shape = 'u32[]', space=smem, size = 0x4, offset = 0x4, fixed_abs, tag = 'smem constant byte address 0x4 - core index']
  #allocation1 [shape = 'u32[144,128]{1,0:T(1,128)}', space=vmem, size = 0x12000, scoped, tag = 'internal scratch']
  %s0 = inlined_call_operand.vmem [shape: s32[8], index: 0, kind: input, shape index: {}]
  %s1 = inlined_call_operand.vmem [shape: f32[8,2,32], index: 1, kind: input, shape index: {}]
  %s2 = inlined_call_operand.vmem [shape: bf16[20,32], index: 2, kind: input, shape index: {}]
  %s3 = inlined_call_operand.vmem [shape: f32[2,32], index: 3, kind: input, shape index: {}]
  %s4 = inlined_call_operand.vmem [shape: f32[7,2,64], index: 4, kind: input, shape index: {}]
  %s5 = inlined_call_operand.vmem [shape: f32[7,2,32], index: 5, kind: input, shape index: {}]
  %s6 = inlined_call_operand.vmem [shape: bf16[32,32], index: 6, kind: input, shape index: {}]
  %s7 = inlined_call_operand.vmem [shape: f32[1,32], index: 7, kind: input, shape index: {}]
  %s8 = inlined_call_operand.vmem [shape: bf16[32,96], index: 8, kind: input, shape index: {}]
  %s9 = inlined_call_operand.vmem [shape: bf16[64,96], index: 9, kind: input, shape index: {}]
  %s10 = inlined_call_operand.vmem [shape: bf16[32,96], index: 10, kind: input, shape index: {}]
  %s11 = inlined_call_operand.vmem [shape: f32[1,96], index: 11, kind: input, shape index: {}]
  %s12 = inlined_call_operand.vmem [shape: f32[1,96], index: 12, kind: input, shape index: {}]
  %s13 = inlined_call_operand.vmem [shape: bf16[32,20], index: 13, kind: input, shape index: {}]
  %s14 = inlined_call_operand.vmem [shape: bf16[64,20], index: 14, kind: input, shape index: {}]
  %s15 = inlined_call_operand.vmem [shape: bf16[32,20], index: 15, kind: input, shape index: {}]
  %s16 = inlined_call_operand.vmem [shape: f32[1,20], index: 16, kind: input, shape index: {}]
  %s17 = inlined_call_operand.hbm [shape: f32[8,2,20], index: 17, kind: output, shape index: {}]
  %s18 = sld [smem:[#allocation0]]
  $region89: #{_forward.3} parent=0
    _
  %s20 = ssub.s32 1, %s18
  %s21 = scalar_select 0, %s20, %s18
  $region1: #{_forward.3} parent=0
    #allocation2 [shape = 'u8[512]{0}', space=smem, size = 0x200, scoped, tag = 'input window, operand 0, single buffered']
    #allocation3 [shape = 's32[1]{0}', space=sflag, size = 0x4, scoped, tag = 'scoped memory for _forward.3']
    #allocation4 [shape = 's32[1]{0}', space=sflag, size = 0x4, scoped, tag = 'scoped memory for _forward.3']
    #allocation5 [shape = 'u8[8192]{0}', space=vmem, size = 0x2000, scoped, tag = 'output window, operand 0, single buffered']
    %22 = vsyncpa [#allocation4], 0
    %23 = vsyncpa [#allocation3], 0
    // Predicated region
    $region2: #{_forward.3} parent=1 // pred_check
      _
    $region3: #{_forward.3} parent=1 // pred_check_branch
      %25 = sbr.rel (0) target = $region5
    $region4: #{_forward.3} parent=1 // pred_region
      %s27 = ssub.s32 16, 16
      %28 = vsyncadd [#allocation4], %s27
      %s30 = sshll.u32 %s0, 4
      %s31 = int_to_ptr.vmem [resolvable:$true] %s30
      %33 = dma.vmem_to_smem %s31, 16, [#allocation2], [#allocation4]
    $region5: #{_forward.3} parent=1 // pred_fallthru
      _
    // Predicated region
    $region6: #{_forward.3} parent=1 // pred_check
      _
    $region7: #{_forward.3} parent=1 // pred_check_branch
      %35 = sbr.rel (0) target = $region9
    $region8: #{_forward.3} parent=1 // pred_region
      _
    $region9: #{_forward.3} parent=1 // pred_fallthru
      _
    // Predicated region
    $region10: #{_forward.3} parent=1 // pred_check
      _
    $region11: #{_forward.3} parent=1 // pred_check_branch
      %37 = sbr.rel (0) target = $region13
    $region12: #{_forward.3} parent=1 // pred_region
      _
    $region13: #{_forward.3} parent=1 // pred_fallthru
      _
    // Predicated region
    $region14: #{_forward.3} parent=1 // pred_check
      _
    $region15: #{_forward.3} parent=1 // pred_check_branch
      %39 = sbr.rel (0) target = $region17
    $region16: #{_forward.3} parent=1 // pred_region
      _
    $region17: #{_forward.3} parent=1 // pred_fallthru
      _
    // Predicated region
    $region18: #{_forward.3} parent=1 // pred_check
      _
    $region19: #{_forward.3} parent=1 // pred_check_branch
      %41 = sbr.rel (0) target = $region21
    $region20: #{_forward.3} parent=1 // pred_region
      _
    $region21: #{_forward.3} parent=1 // pred_fallthru
      _
    // Predicated region
    $region22: #{_forward.3} parent=1 // pred_check
      _
    $region23: #{_forward.3} parent=1 // pred_check_branch
      %43 = sbr.rel (0) target = $region25
    $region24: #{_forward.3} parent=1 // pred_region
      _
    $region25: #{_forward.3} parent=1 // pred_fallthru
      _
    // Predicated region
    $region26: #{_forward.3} parent=1 // pred_check
      _
    $region27: #{_forward.3} parent=1 // pred_check_branch
      %45 = sbr.rel (0) target = $region29
    $region28: #{_forward.3} parent=1 // pred_region
      _
    $region29: #{_forward.3} parent=1 // pred_fallthru
      _
    // Predicated region
    $region30: #{_forward.3} parent=1 // pred_check
      _
    $region31: #{_forward.3} parent=1 // pred_check_branch
      %47 = sbr.rel (0) target = $region33
    $region32: #{_forward.3} parent=1 // pred_region
      _
    $region33: #{_forward.3} parent=1 // pred_fallthru
      _
    // Predicated region
    $region34: #{_forward.3} parent=1 // pred_check
      _
    $region35: #{_forward.3} parent=1 // pred_check_branch
      %49 = sbr.rel (0) target = $region37
    $region36: #{_forward.3} parent=1 // pred_region
      _
    $region37: #{_forward.3} parent=1 // pred_fallthru
      _
    // Predicated region
    $region38: #{_forward.3} parent=1 // pred_check
      _
    $region39: #{_forward.3} parent=1 // pred_check_branch
      %51 = sbr.rel (0) target = $region41
    $region40: #{_forward.3} parent=1 // pred_region
      _
    $region41: #{_forward.3} parent=1 // pred_fallthru
      _
    // Predicated region
    $region42: #{_forward.3} parent=1 // pred_check
      _
    $region43: #{_forward.3} parent=1 // pred_check_branch
      %53 = sbr.rel (0) target = $region45
    $region44: #{_forward.3} parent=1 // pred_region
      _
    $region45: #{_forward.3} parent=1 // pred_fallthru
      _
    // Predicated region
    $region46: #{_forward.3} parent=1 // pred_check
      _
    $region47: #{_forward.3} parent=1 // pred_check_branch
      %55 = sbr.rel (0) target = $region49
    $region48: #{_forward.3} parent=1 // pred_region
      _
    $region49: #{_forward.3} parent=1 // pred_fallthru
      _
    // Predicated region
    $region50: #{_forward.3} parent=1 // pred_check
      _
    $region51: #{_forward.3} parent=1 // pred_check_branch
      %57 = sbr.rel (0) target = $region53
    $region52: #{_forward.3} parent=1 // pred_region
      _
    $region53: #{_forward.3} parent=1 // pred_fallthru
      _
    // Predicated region
    $region54: #{_forward.3} parent=1 // pred_check
      _
    $region55: #{_forward.3} parent=1 // pred_check_branch
      %59 = sbr.rel (0) target = $region57
    $region56: #{_forward.3} parent=1 // pred_region
      _
    $region57: #{_forward.3} parent=1 // pred_fallthru
      _
    // Predicated region
    $region58: #{_forward.3} parent=1 // pred_check
      _
    $region59: #{_forward.3} parent=1 // pred_check_branch
      %61 = sbr.rel (0) target = $region61
    $region60: #{_forward.3} parent=1 // pred_region
      _
    $region61: #{_forward.3} parent=1 // pred_fallthru
      _
    // Predicated region
    $region62: #{_forward.3} parent=1 // pred_check
      _
    $region63: #{_forward.3} parent=1 // pred_check_branch
      %63 = sbr.rel (0) target = $region65
    $region64: #{_forward.3} parent=1 // pred_region
      _
    $region65: #{_forward.3} parent=1 // pred_fallthru
      _
    // Predicated region
    $region66: #{_forward.3} parent=1 // pred_check
      _
    $region67: #{_forward.3} parent=1 // pred_check_branch
      %65 = sbr.rel (0) target = $region69
    $region68: #{_forward.3} parent=1 // pred_region
      _
    $region69: #{_forward.3} parent=1 // pred_fallthru
      _
    // Predicated region
    $region70: #{_forward.3} parent=1 // pred_check
      _
    $region71: #{_forward.3} parent=1 // pred_check_branch
      %67 = sbr.rel (0) target = $region73
    $region72: #{_forward.3} parent=1 // pred_region
      %68 = dma.done [#allocation4], 16
    $region73: #{_forward.3} parent=1 // pred_fallthru
      _
    %69 = sfence
    %v71 = vld [vmem:[%s4] sm:$0x3]
    %v72 = vld [vmem:[%s4 + $0x2] sm:$0x3]
    %v73 = vld [vmem:[%s4 + $0x4] sm:$0x3]
    %v74 = vld [vmem:[%s4 + $0x6] sm:$0x3]
    %v75 = vld [vmem:[%s4 + $0x8] sm:$0x3]
    %v76 = vld [vmem:[%s4 + $0xa] sm:$0x3]
    %v77 = vld [vmem:[%s4 + $0xc] sm:$0x3]
    %v78 = vld [vmem:[%s5] sm:$0x3]
    %v79 = vld [vmem:[%s5 + $0x2] sm:$0x3]
    %v80 = vld [vmem:[%s5 + $0x4] sm:$0x3]
    %v81 = vld [vmem:[%s5 + $0x6] sm:$0x3]
    %v82 = vld [vmem:[%s5 + $0x8] sm:$0x3]
    %v83 = vld [vmem:[%s5 + $0xa] sm:$0x3]
    %v84 = vld [vmem:[%s5 + $0xc] sm:$0x3]
    %v85 = vld [vmem:[%s6] sm:$0xf]
    %v86 = vld [vmem:[%s6 + $0x4] sm:$0xf]
    %v87 = vld [vmem:[%s6 + $0x8] sm:$0xf]
    %v88 = vld [vmem:[%s6 + $0xc] sm:$0xf]
    %v89 = vld [vmem:[%s7] sm:$0x1]
    %v90 = vld [vmem:[%s2] sm:$0xf]
    %v91 = vld [vmem:[%s2 + $0x4] sm:$0xf]
    %v92 = vld [vmem:[%s2 + $0x8] sm:$0x3]
    %v93 = vld [vmem:[%s8] sm:$0xf]
    %v94 = vld [vmem:[%s8 + $0x4] sm:$0xf]
    %v95 = vld [vmem:[%s8 + $0x8] sm:$0xf]
    %v96 = vld [vmem:[%s8 + $0xc] sm:$0xf]
    %v97 = vld [vmem:[%s9] sm:$0xf]
    %v98 = vld [vmem:[%s9 + $0x4] sm:$0xf]
    %v99 = vld [vmem:[%s9 + $0x8] sm:$0xf]
    %v100 = vld [vmem:[%s9 + $0xc] sm:$0xf]
    %v101 = vld [vmem:[%s9 + $0x10] sm:$0xf]
    %v102 = vld [vmem:[%s9 + $0x14] sm:$0xf]
    %v103 = vld [vmem:[%s9 + $0x18] sm:$0xf]
    %v104 = vld [vmem:[%s9 + $0x1c] sm:$0xf]
    %v105 = vld [vmem:[%s10] sm:$0xf]
    %v106 = vld [vmem:[%s10 + $0x4] sm:$0xf]
    %v107 = vld [vmem:[%s10 + $0x8] sm:$0xf]
    %v108 = vld [vmem:[%s10 + $0xc] sm:$0xf]
    %v109 = vld [vmem:[%s11] sm:$0x1]
    %v110 = vld [vmem:[%s12] sm:$0x1]
    %v111 = vld [vmem:[%s13] sm:$0xf]
    %v112 = vld [vmem:[%s13 + $0x4] sm:$0xf]
    %v113 = vld [vmem:[%s13 + $0x8] sm:$0xf]
    %v114 = vld [vmem:[%s13 + $0xc] sm:$0xf]
    %v115 = vld [vmem:[%s14] sm:$0xf]
    %v116 = vld [vmem:[%s14 + $0x4] sm:$0xf]
    %v117 = vld [vmem:[%s14 + $0x8] sm:$0xf]
    %v118 = vld [vmem:[%s14 + $0xc] sm:$0xf]
    %v119 = vld [vmem:[%s14 + $0x10] sm:$0xf]
    %v120 = vld [vmem:[%s14 + $0x14] sm:$0xf]
    %v121 = vld [vmem:[%s14 + $0x18] sm:$0xf]
    %v122 = vld [vmem:[%s14 + $0x1c] sm:$0xf]
    %v123 = vld [vmem:[%s15] sm:$0xf]
    %v124 = vld [vmem:[%s15 + $0x4] sm:$0xf]
    %v125 = vld [vmem:[%s15 + $0x8] sm:$0xf]
    %v126 = vld [vmem:[%s15 + $0xc] sm:$0xf]
    %v127 = vld [vmem:[%s16] sm:$0x1]
    %vm128 = vcmask 156672
    %129 = vst.msk [vmem:[#allocation5] sm:$0x3] %vm128, 0.0
    %v130 = vld [vmem:[%s1] sm:$0x3]
    %v131 = vld [vmem:[%s3] sm:$0x3]
    loop: start=1, step=1, limit=8
    $region74: #{_forward.3} parent=1 // loop_pre_header
      _
    $region75: #{_forward.3} parent=1 // loop_header
      %s133 = sphi 1, %s137
      %p134 = scmp.ge.s32.totalorder %s133, 8
      %v138 = vphi %v130, %v818
      %v139 = vphi %v131, %v821
    $region76: #{_forward.3} parent=1 // loop_header_branch
      %136 = sbr.rel (%p134) target = $region80
    $region77: #{_forward.3} parent=1 // loop_body
      %v140 = vpack.c.bf16 %v138, %v138
      %v141 = vpack.c.bf16 %v139, %v139
      %v146 = vunpack.c.l.b16 %v85
      %v147 = vunpack.c.l.b16 %v86
      %v148 = vunpack.c.l.b16 %v87
      %v149 = vunpack.c.l.b16 %v88
      %v150 = vpack.c.b16 %v147, %v146
      %v151 = vpack.c.b16 %v149, %v148
      %vm154 = vcmask 261120
      %v156 = vsel %vm154, %v141, 0
      %158 = vmatprep.subr.bf16.mxu0 0
      %159 = vmatpush1.bf16.msra.mxu0 0
      %160 = vmatprep.subr.bf16.mxu0 0
      %161 = vmatpush1.bf16.msra.mxu0 0
      %162 = vmatprep.subr.bf16.mxu0 0
      %163 = vmatpush1.bf16.msra.mxu0 0
      %164 = vmatprep.subr.bf16.mxu0 0
      %165 = vmatpush1.bf16.msra.mxu0 0
      %166 = vmatprep.subr.bf16.mxu0 0
      %167 = vmatpush1.bf16.msra.mxu0 0
      %168 = vmatprep.subr.bf16.mxu0 0
      %169 = vmatpush1.bf16.msra.mxu0 0
      %170 = vmatprep.subr.bf16.mxu0 0
      %171 = vmatpush1.bf16.msra.mxu0 %v151
      %172 = vmatprep.subr.bf16.mxu0 0
      %173 = vmatpush1.bf16.msra.mxu0 %v150
      %174 = vmatprep.subr.bf16.mxu0 0
      %175 = vmatpush2.bf16.msra.mxu0 0
      %176 = vmatprep.subr.bf16.mxu0 0
      %177 = vmatpush2.bf16.msra.mxu0 0
      %178 = vmatprep.subr.bf16.mxu0 0
      %179 = vmatpush2.bf16.msra.mxu0 0
      %180 = vmatprep.subr.bf16.mxu0 0
      %181 = vmatpush2.bf16.msra.mxu0 0
      %182 = vmatprep.subr.bf16.mxu0 0
      %183 = vmatpush2.bf16.msra.mxu0 0
      %184 = vmatprep.subr.bf16.mxu0 0
      %185 = vmatpush2.bf16.msra.mxu0 0
      %186 = vmatprep.subr.bf16.mxu0 0
      %187 = vmatpush2.bf16.msra.mxu0 0
      %188 = vmatprep.subr.bf16.mxu0 0
      %189 = vmatpush2.bf16.msra.mxu0 0
      %190 = vmatprep.mubr.bf16.mxu0 0
      %191 = vmatmul.mubr.bf16.gmra.mxu0 %v156
      %v192 = vpop.f32.mrf.mxu0
      %v193 = vadd.f32 0.0, %v192
      %v194 = vpop.f32.mrf.mxu0
      %v195 = vpop.f32.mrf.mxu0
      %v196 = vpop.f32.mrf.mxu0
      %197 = vdwg.mxu0
      %v198 = vadd.f32 %v78, %v193
      %v199 = vadd.f32 %v79, %v193
      %v200 = vadd.f32 %v80, %v193
      %v201 = vadd.f32 %v81, %v193
      %v202 = vadd.f32 %v82, %v193
      %v203 = vadd.f32 %v83, %v193
      %v204 = vadd.f32 %v84, %v193
      %v205 = vtanh.pop %v198
      %v206 = vtanh.pop %v199
      %v207 = vtanh.pop %v200
      %v208 = vtanh.pop %v201
      %v209 = vtanh.pop %v202
      %v210 = vtanh.pop %v203
      %v211 = vtanh.pop %v204
      %v213 = vlaneseq
      %v214 = vshrl.u32 %v213, 7
      %v215 = vsub.s32 0, %v214
      %v216 = vrot.slane %v89, %v215
      %v218 = vmul.f32 %v205, %v216
      %v219 = vmul.f32 %v206, %v216
      %v220 = vmul.f32 %v207, %v216
      %v221 = vmul.f32 %v208, %v216
      %v222 = vmul.f32 %v209, %v216
      %v223 = vmul.f32 %v210, %v216
      %v224 = vmul.f32 %v211, %v216
      %vm225 = vcmask 254976
      %v226 = vsel %vm225, %v218, 0.0
      %227 = vadd.xlane.f32.xlu0 %v226
      %v228 = vpop.xlane.xlu0 %227
      %v229 = vsel %vm225, %v219, 0.0
      %230 = vadd.xlane.f32.xlu0 %v229
      %v231 = vpop.xlane.xlu0 %230
      %v232 = vsel %vm225, %v220, 0.0
      %233 = vadd.xlane.f32.xlu0 %v232
      %v234 = vpop.xlane.xlu0 %233
      %v235 = vsel %vm225, %v221, 0.0
      %236 = vadd.xlane.f32.xlu0 %v235
      %v237 = vpop.xlane.xlu0 %236
      %v238 = vsel %vm225, %v222, 0.0
      %239 = vadd.xlane.f32.xlu0 %v238
      %v240 = vpop.xlane.xlu0 %239
      %v241 = vsel %vm225, %v223, 0.0
      %242 = vadd.xlane.f32.xlu0 %v241
      %v243 = vpop.xlane.xlu0 %242
      %v244 = vsel %vm225, %v224, 0.0
      %245 = vadd.xlane.f32.xlu0 %v244
      %v246 = vpop.xlane.xlu0 %245
      %vm247 = vcmask 1041408
      %v248 = vsel %vm247, %v228, -inf
      %v249 = vsel %vm247, %v231, -inf
      %v250 = vsel %vm247, %v234, -inf
      %v251 = vsel %vm247, %v237, -inf
      %v252 = vsel %vm247, %v240, -inf
      %v253 = vmax.f32 %v248, %v252
      %v254 = vsel %vm247, %v243, -inf
      %v255 = vmax.f32 %v249, %v254
      %v256 = vsel %vm247, %v246, -inf
      %v257 = vmax.f32 %v250, %v256
      %v258 = vmax.f32 %v253, %v255
      %v259 = vmax.f32 %v257, %v251
      %v260 = vmax.f32 %v258, %v259
      %v261 = vsub.f32 %v228, %v260
      %v262 = vsub.f32 %v231, %v260
      %v263 = vsub.f32 %v234, %v260
      %v264 = vsub.f32 %v237, %v260
      %v265 = vsub.f32 %v240, %v260
      %v266 = vsub.f32 %v243, %v260
      %v267 = vsub.f32 %v246, %v260
      %v268 = vmul.f32 %v261, 1.442695
      %v269 = vpow.pop %v268
      %v270 = vmul.f32 %v262, 1.442695
      %v271 = vpow.pop %v270
      %v272 = vmul.f32 %v263, 1.442695
      %v273 = vpow.pop %v272
      %v274 = vmul.f32 %v264, 1.442695
      %v275 = vpow.pop %v274
      %v276 = vmul.f32 %v265, 1.442695
      %v277 = vpow.pop %v276
      %v278 = vmul.f32 %v266, 1.442695
      %v279 = vpow.pop %v278
      %v280 = vmul.f32 %v267, 1.442695
      %v281 = vpow.pop %v280
      %v282 = vsel %vm247, %v269, 0.0
      %v283 = vsel %vm247, %v271, 0.0
      %v284 = vadd.f32 %v282, %v283
      %v285 = vsel %vm247, %v273, 0.0
      %v286 = vadd.f32 %v284, %v285
      %v287 = vsel %vm247, %v275, 0.0
      %v288 = vadd.f32 %v286, %v287
      %v289 = vsel %vm247, %v277, 0.0
      %v290 = vadd.f32 %v288, %v289
      %v291 = vsel %vm247, %v279, 0.0
      %v292 = vadd.f32 %v290, %v291
      %v293 = vsel %vm247, %v281, 0.0
      %v294 = vadd.f32 %v292, %v293
      %v295 = vrcp.pop %v294
      %v296 = vmul.f32 %v269, %v295
      %v297 = vmul.f32 %v271, %v295
      %v298 = vmul.f32 %v273, %v295
      %v299 = vmul.f32 %v275, %v295
      %v300 = vmul.f32 %v277, %v295
      %v301 = vmul.f32 %v279, %v295
      %v302 = vmul.f32 %v281, %v295
      %v303 = vmul.f32 %v296, %v71
      %v304 = vmul.f32 %v297, %v72
      %v305 = vmul.f32 %v298, %v73
      %v306 = vmul.f32 %v299, %v74
      %v307 = vmul.f32 %v300, %v75
      %v308 = vmul.f32 %v301, %v76
      %v309 = vmul.f32 %v302, %v77
      %vm310 = vcmask 517120
      %v311 = vsel %vm310, %v303, 0.0
      %v312 = vsel %vm310, %v304, 0.0
      %v313 = vadd.f32 %v311, %v312
      %v314 = vsel %vm310, %v305, 0.0
      %v315 = vadd.f32 %v313, %v314
      %v316 = vsel %vm310, %v306, 0.0
      %v317 = vadd.f32 %v315, %v316
      %v318 = vsel %vm310, %v307, 0.0
      %v319 = vadd.f32 %v317, %v318
      %v320 = vsel %vm310, %v308, 0.0
      %v321 = vadd.f32 %v319, %v320
      %v322 = vsel %vm310, %v309, 0.0
      %v323 = vadd.f32 %v321, %v322
      %v324 = vpack.c.bf16 %v323, %v323
      %v333 = vunpack.c.l.b16 %v97
      %v334 = vunpack.c.l.b16 %v98
      %v335 = vunpack.c.l.b16 %v99
      %v336 = vunpack.c.l.b16 %v100
      %v337 = vunpack.c.l.b16 %v101
      %v338 = vunpack.c.l.b16 %v102
      %v339 = vunpack.c.l.b16 %v103
      %v340 = vunpack.c.l.b16 %v104
      %v341 = vpack.c.b16 %v334, %v333
      %v342 = vpack.c.b16 %v336, %v335
      %v343 = vpack.c.b16 %v338, %v337
      %v344 = vpack.c.b16 %v340, %v339
      %vm349 = vcmask 523264
      %v351 = vsel %vm349, %v324, 0
      %353 = vmatprep.subr.bf16.mxu0 0
      %354 = vmatpush1.bf16.msra.mxu0 0
      %355 = vmatprep.subr.bf16.mxu0 0
      %356 = vmatpush1.bf16.msra.mxu0 0
      %357 = vmatprep.subr.bf16.mxu0 0
      %358 = vmatpush1.bf16.msra.mxu0 0
      %359 = vmatprep.subr.bf16.mxu0 0
      %360 = vmatpush1.bf16.msra.mxu0 0
      %361 = vmatprep.subr.bf16.mxu0 0
      %362 = vmatpush1.bf16.msra.mxu0 %v344
      %363 = vmatprep.subr.bf16.mxu0 0
      %364 = vmatpush1.bf16.msra.mxu0 %v343
      %365 = vmatprep.subr.bf16.mxu0 0
      %366 = vmatpush1.bf16.msra.mxu0 %v342
      %367 = vmatprep.subr.bf16.mxu0 0
      %368 = vmatpush1.bf16.msra.mxu0 %v341
      %369 = vmatprep.subr.bf16.mxu0 0
      %370 = vmatpush2.bf16.msra.mxu0 0
      %371 = vmatprep.subr.bf16.mxu0 0
      %372 = vmatpush2.bf16.msra.mxu0 0
      %373 = vmatprep.subr.bf16.mxu0 0
      %374 = vmatpush2.bf16.msra.mxu0 0
      %375 = vmatprep.subr.bf16.mxu0 0
      %376 = vmatpush2.bf16.msra.mxu0 0
      %377 = vmatprep.subr.bf16.mxu0 0
      %378 = vmatpush2.bf16.msra.mxu0 0
      %379 = vmatprep.subr.bf16.mxu0 0
      %380 = vmatpush2.bf16.msra.mxu0 0
      %381 = vmatprep.subr.bf16.mxu0 0
      %382 = vmatpush2.bf16.msra.mxu0 0
      %383 = vmatprep.subr.bf16.mxu0 0
      %384 = vmatpush2.bf16.msra.mxu0 0
      %385 = vmatprep.mubr.bf16.mxu0 0
      %386 = vmatmul.mubr.bf16.gmra.mxu0 %v351
      %v387 = vpop.f32.mrf.mxu0
      %v388 = vadd.f32 0.0, %v387
      %v389 = vpop.f32.mrf.mxu0
      %v390 = vpop.f32.mrf.mxu0
      %v391 = vpop.f32.mrf.mxu0
      %392 = vdwg.mxu0
      %v397 = vunpack.c.l.b16 %v93
      %v398 = vunpack.c.l.b16 %v94
      %v399 = vunpack.c.l.b16 %v95
      %v400 = vunpack.c.l.b16 %v96
      %v401 = vpack.c.b16 %v398, %v397
      %v402 = vpack.c.b16 %v400, %v399
      %v406 = vsel %vm154, %v140, 0
      %408 = vmatprep.subr.bf16.mxu0 0
      %409 = vmatpush1.bf16.msra.mxu0 0
      %410 = vmatprep.subr.bf16.mxu0 0
      %411 = vmatpush1.bf16.msra.mxu0 0
      %412 = vmatprep.subr.bf16.mxu0 0
      %413 = vmatpush1.bf16.msra.mxu0 0
      %414 = vmatprep.subr.bf16.mxu0 0
      %415 = vmatpush1.bf16.msra.mxu0 0
      %416 = vmatprep.subr.bf16.mxu0 0
      %417 = vmatpush1.bf16.msra.mxu0 0
      %418 = vmatprep.subr.bf16.mxu0 0
      %419 = vmatpush1.bf16.msra.mxu0 0
      %420 = vmatprep.subr.bf16.mxu0 0
      %421 = vmatpush1.bf16.msra.mxu0 %v402
      %422 = vmatprep.subr.bf16.mxu0 0
      %423 = vmatpush1.bf16.msra.mxu0 %v401
      %424 = vmatprep.subr.bf16.mxu0 0
      %425 = vmatpush2.bf16.msra.mxu0 0
      %426 = vmatprep.subr.bf16.mxu0 0
      %427 = vmatpush2.bf16.msra.mxu0 0
      %428 = vmatprep.subr.bf16.mxu0 0
      %429 = vmatpush2.bf16.msra.mxu0 0
      %430 = vmatprep.subr.bf16.mxu0 0
      %431 = vmatpush2.bf16.msra.mxu0 0
      %432 = vmatprep.subr.bf16.mxu0 0
      %433 = vmatpush2.bf16.msra.mxu0 0
      %434 = vmatprep.subr.bf16.mxu0 0
      %435 = vmatpush2.bf16.msra.mxu0 0
      %436 = vmatprep.subr.bf16.mxu0 0
      %437 = vmatpush2.bf16.msra.mxu0 0
      %438 = vmatprep.subr.bf16.mxu0 0
      %439 = vmatpush2.bf16.msra.mxu0 0
      %440 = vmatprep.mubr.bf16.mxu0 0
      %441 = vmatmul.mubr.bf16.gmra.mxu0 %v406
      %v442 = vpop.f32.mrf.mxu0
      %v443 = vadd.f32 %v388, %v442
      %v444 = vpop.f32.mrf.mxu0
      %v445 = vpop.f32.mrf.mxu0
      %v446 = vpop.f32.mrf.mxu0
      %447 = vdwg.mxu0
      %v449 = vlaneseq
      %v450 = vshrl.u32 %v449, 7
      %v451 = vsub.s32 0, %v450
      %v452 = vrot.slane %v109, %v451
      %v454 = vadd.f32 %v443, %v452
      %v456 = vlaneseq
      %v457 = vshrl.u32 %v456, 7
      %v458 = vsub.s32 0, %v457
      %v459 = vrot.slane %v110, %v458
      %v465 = vunpack.c.l.b16 %v105
      %v466 = vunpack.c.l.b16 %v106
      %v467 = vunpack.c.l.b16 %v107
      %v468 = vunpack.c.l.b16 %v108
      %v469 = vpack.c.b16 %v466, %v465
      %v470 = vpack.c.b16 %v468, %v467
      %473 = vmatprep.subr.bf16.mxu0 0
      %474 = vmatpush1.bf16.msra.mxu0 0
      %475 = vmatprep.subr.bf16.mxu0 0
      %476 = vmatpush1.bf16.msra.mxu0 0
      %477 = vmatprep.subr.bf16.mxu0 0
      %478 = vmatpush1.bf16.msra.mxu0 0
      %479 = vmatprep.subr.bf16.mxu0 0
      %480 = vmatpush1.bf16.msra.mxu0 0
      %481 = vmatprep.subr.bf16.mxu0 0
      %482 = vmatpush1.bf16.msra.mxu0 0
      %483 = vmatprep.subr.bf16.mxu0 0
      %484 = vmatpush1.bf16.msra.mxu0 0
      %485 = vmatprep.subr.bf16.mxu0 0
      %486 = vmatpush1.bf16.msra.mxu0 %v470
      %487 = vmatprep.subr.bf16.mxu0 0
      %488 = vmatpush1.bf16.msra.mxu0 %v469
      %489 = vmatprep.subr.bf16.mxu0 0
      %490 = vmatpush2.bf16.msra.mxu0 0
      %491 = vmatprep.subr.bf16.mxu0 0
      %492 = vmatpush2.bf16.msra.mxu0 0
      %493 = vmatprep.subr.bf16.mxu0 0
      %494 = vmatpush2.bf16.msra.mxu0 0
      %495 = vmatprep.subr.bf16.mxu0 0
      %496 = vmatpush2.bf16.msra.mxu0 0
      %497 = vmatprep.subr.bf16.mxu0 0
      %498 = vmatpush2.bf16.msra.mxu0 0
      %499 = vmatprep.subr.bf16.mxu0 0
      %500 = vmatpush2.bf16.msra.mxu0 0
      %501 = vmatprep.subr.bf16.mxu0 0
      %502 = vmatpush2.bf16.msra.mxu0 0
      %503 = vmatprep.subr.bf16.mxu0 0
      %504 = vmatpush2.bf16.msra.mxu0 0
      %505 = vmatprep.mubr.bf16.mxu0 0
      %506 = vmatmul.mubr.bf16.gmra.mxu0 %v156
      %v507 = vpop.f32.mrf.mxu0
      %v508 = vadd.f32 %v459, %v507
      %v509 = vpop.f32.mrf.mxu0
      %v510 = vpop.f32.mrf.mxu0
      %v511 = vpop.f32.mrf.mxu0
      %512 = vdwg.mxu0
      %v513 = vadd.f32 %v454, %v508
      %v514 = vxor.u32 %v513, 2147483648
      %v515 = vmul.f32 %v514, 1.442695
      %v516 = vpow.pop %v515
      %v517 = vadd.f32 %v516, 1.0
      %v518 = vrcp.pop %v517
      %v519 = vmul.f32 1.0, %v518
      %521 = vrot.lane.b32.xlu0 %v508, 64
      %v522 = vpop.permute.xlu0 %521
      %v524 = vmul.f32 %v519, %v522
      %526 = vrot.lane.b32.xlu0 %v524, 64
      %v527 = vpop.permute.xlu0 %526
      %v529 = vadd.f32 %v454, %v527
      %v530 = vtanh.pop %v529
      %v531 = vsub.f32 1.0, %v519
      %533 = vrot.lane.b32.xlu0 %v530, 96
      %v534 = vpop.permute.xlu0 %533
      %v536 = vmul.f32 %v531, %v534
      %538 = vrot.lane.b32.xlu0 %v139, 32
      %v539 = vpop.permute.xlu0 %538
      %v541 = vmul.f32 %v519, %v539
      %v542 = vadd.f32 %v536, %v541
      %v543 = vpack.c.bf16 %v542, %v542
      %v552 = vunpack.c.l.b16 %v115
      %v553 = vunpack.c.l.b16 %v116
      %v554 = vunpack.c.l.b16 %v117
      %v555 = vunpack.c.l.b16 %v118
      %v556 = vunpack.c.l.b16 %v119
      %v557 = vunpack.c.l.b16 %v120
      %v558 = vunpack.c.l.b16 %v121
      %v559 = vunpack.c.l.b16 %v122
      %v560 = vpack.c.b16 %v553, %v552
      %v561 = vpack.c.b16 %v555, %v554
      %v562 = vpack.c.b16 %v557, %v556
      %v563 = vpack.c.b16 %v559, %v558
      %568 = vmatprep.subr.bf16.mxu0 0
      %569 = vmatpush1.bf16.msra.mxu0 0
      %570 = vmatprep.subr.bf16.mxu0 0
      %571 = vmatpush1.bf16.msra.mxu0 0
      %572 = vmatprep.subr.bf16.mxu0 0
      %573 = vmatpush1.bf16.msra.mxu0 0
      %574 = vmatprep.subr.bf16.mxu0 0
      %575 = vmatpush1.bf16.msra.mxu0 0
      %576 = vmatprep.subr.bf16.mxu0 0
      %577 = vmatpush1.bf16.msra.mxu0 %v563
      %578 = vmatprep.subr.bf16.mxu0 0
      %579 = vmatpush1.bf16.msra.mxu0 %v562
      %580 = vmatprep.subr.bf16.mxu0 0
      %581 = vmatpush1.bf16.msra.mxu0 %v561
      %582 = vmatprep.subr.bf16.mxu0 0
      %583 = vmatpush1.bf16.msra.mxu0 %v560
      %584 = vmatprep.subr.bf16.mxu0 0
      %585 = vmatpush2.bf16.msra.mxu0 0
      %586 = vmatprep.subr.bf16.mxu0 0
      %587 = vmatpush2.bf16.msra.mxu0 0
      %588 = vmatprep.subr.bf16.mxu0 0
      %589 = vmatpush2.bf16.msra.mxu0 0
      %590 = vmatprep.subr.bf16.mxu0 0
      %591 = vmatpush2.bf16.msra.mxu0 0
      %592 = vmatprep.subr.bf16.mxu0 0
      %593 = vmatpush2.bf16.msra.mxu0 0
      %594 = vmatprep.subr.bf16.mxu0 0
      %595 = vmatpush2.bf16.msra.mxu0 0
      %596 = vmatprep.subr.bf16.mxu0 0
      %597 = vmatpush2.bf16.msra.mxu0 0
      %598 = vmatprep.subr.bf16.mxu0 0
      %599 = vmatpush2.bf16.msra.mxu0 0
      %600 = vmatprep.mubr.bf16.mxu0 0
      %601 = vmatmul.mubr.bf16.gmra.mxu0 %v351
      %v602 = vpop.f32.mrf.mxu0
      %v603 = vadd.f32 0.0, %v602
      %v604 = vpop.f32.mrf.mxu0
      %v605 = vpop.f32.mrf.mxu0
      %v606 = vpop.f32.mrf.mxu0
      %607 = vdwg.mxu0
      %609 = vrot.lane.b32.xlu0 %v543, 96
      %v610 = vpop.permute.xlu0 %609
      %v615 = vunpack.c.l.b16 %v111
      %v616 = vunpack.c.l.b16 %v112
      %v617 = vunpack.c.l.b16 %v113
      %v618 = vunpack.c.l.b16 %v114
      %v619 = vpack.c.b16 %v616, %v615
      %v620 = vpack.c.b16 %v618, %v617
      %v624 = vsel %vm154, %v610, 0
      %626 = vmatprep.subr.bf16.mxu0 0
      %627 = vmatpush1.bf16.msra.mxu0 0
      %628 = vmatprep.subr.bf16.mxu0 0
      %629 = vmatpush1.bf16.msra.mxu0 0
      %630 = vmatprep.subr.bf16.mxu0 0
      %631 = vmatpush1.bf16.msra.mxu0 0
      %632 = vmatprep.subr.bf16.mxu0 0
      %633 = vmatpush1.bf16.msra.mxu0 0
      %634 = vmatprep.subr.bf16.mxu0 0
      %635 = vmatpush1.bf16.msra.mxu0 0
      %636 = vmatprep.subr.bf16.mxu0 0
      %637 = vmatpush1.bf16.msra.mxu0 0
      %638 = vmatprep.subr.bf16.mxu0 0
      %639 = vmatpush1.bf16.msra.mxu0 %v620
      %640 = vmatprep.subr.bf16.mxu0 0
      %641 = vmatpush1.bf16.msra.mxu0 %v619
      %642 = vmatprep.subr.bf16.mxu0 0
      %643 = vmatpush2.bf16.msra.mxu0 0
      %644 = vmatprep.subr.bf16.mxu0 0
      %645 = vmatpush2.bf16.msra.mxu0 0
      %646 = vmatprep.subr.bf16.mxu0 0
      %647 = vmatpush2.bf16.msra.mxu0 0
      %648 = vmatprep.subr.bf16.mxu0 0
      %649 = vmatpush2.bf16.msra.mxu0 0
      %650 = vmatprep.subr.bf16.mxu0 0
      %651 = vmatpush2.bf16.msra.mxu0 0
      %652 = vmatprep.subr.bf16.mxu0 0
      %653 = vmatpush2.bf16.msra.mxu0 0
      %654 = vmatprep.subr.bf16.mxu0 0
      %655 = vmatpush2.bf16.msra.mxu0 0
      %656 = vmatprep.subr.bf16.mxu0 0
      %657 = vmatpush2.bf16.msra.mxu0 0
      %658 = vmatprep.mubr.bf16.mxu0 0
      %659 = vmatmul.mubr.bf16.gmra.mxu0 %v624
      %v660 = vpop.f32.mrf.mxu0
      %v661 = vadd.f32 %v603, %v660
      %v662 = vpop.f32.mrf.mxu0
      %v663 = vpop.f32.mrf.mxu0
      %v664 = vpop.f32.mrf.mxu0
      %665 = vdwg.mxu0
      %v670 = vunpack.c.l.b16 %v123
      %v671 = vunpack.c.l.b16 %v124
      %v672 = vunpack.c.l.b16 %v125
      %v673 = vunpack.c.l.b16 %v126
      %v674 = vpack.c.b16 %v671, %v670
      %v675 = vpack.c.b16 %v673, %v672
      %678 = vmatprep.subr.bf16.mxu0 0
      %679 = vmatpush1.bf16.msra.mxu0 0
      %680 = vmatprep.subr.bf16.mxu0 0
      %681 = vmatpush1.bf16.msra.mxu0 0
      %682 = vmatprep.subr.bf16.mxu0 0
      %683 = vmatpush1.bf16.msra.mxu0 0
      %684 = vmatprep.subr.bf16.mxu0 0
      %685 = vmatpush1.bf16.msra.mxu0 0
      %686 = vmatprep.subr.bf16.mxu0 0
      %687 = vmatpush1.bf16.msra.mxu0 0
      %688 = vmatprep.subr.bf16.mxu0 0
      %689 = vmatpush1.bf16.msra.mxu0 0
      %690 = vmatprep.subr.bf16.mxu0 0
      %691 = vmatpush1.bf16.msra.mxu0 %v675
      %692 = vmatprep.subr.bf16.mxu0 0
      %693 = vmatpush1.bf16.msra.mxu0 %v674
      %694 = vmatprep.subr.bf16.mxu0 0
      %695 = vmatpush2.bf16.msra.mxu0 0
      %696 = vmatprep.subr.bf16.mxu0 0
      %697 = vmatpush2.bf16.msra.mxu0 0
      %698 = vmatprep.subr.bf16.mxu0 0
      %699 = vmatpush2.bf16.msra.mxu0 0
      %700 = vmatprep.subr.bf16.mxu0 0
      %701 = vmatpush2.bf16.msra.mxu0 0
      %702 = vmatprep.subr.bf16.mxu0 0
      %703 = vmatpush2.bf16.msra.mxu0 0
      %704 = vmatprep.subr.bf16.mxu0 0
      %705 = vmatpush2.bf16.msra.mxu0 0
      %706 = vmatprep.subr.bf16.mxu0 0
      %707 = vmatpush2.bf16.msra.mxu0 0
      %708 = vmatprep.subr.bf16.mxu0 0
      %709 = vmatpush2.bf16.msra.mxu0 0
      %710 = vmatprep.mubr.bf16.mxu0 0
      %711 = vmatmul.mubr.bf16.gmra.mxu0 %v406
      %v712 = vpop.f32.mrf.mxu0
      %v713 = vadd.f32 0.0, %v712
      %v714 = vpop.f32.mrf.mxu0
      %v715 = vpop.f32.mrf.mxu0
      %v716 = vpop.f32.mrf.mxu0
      %717 = vdwg.mxu0
      %v718 = vadd.f32 %v661, %v713
      %v720 = vlaneseq
      %v721 = vshrl.u32 %v720, 7
      %v722 = vsub.s32 0, %v721
      %v723 = vrot.slane %v127, %v722
      %v725 = vadd.f32 %v718, %v723
      %s726 = smul.u32 %s133, 2
      %s727 = scalar_lea.vmem [#allocation5], %s726
      %728 = vst.msk [vmem:[%s727] sm:$0x3] %vm128, %v725
      %v729 = vlaneseq
      %v730 = vand.u32 %v729, 127
      %v731 = vsel %vm128, %v725, -inf
      %732 = vmax.xlane.f32.xlu0 %v731
      %v733 = vpop.xlane.xlu0 %732
      %vm734 = vcmp.eq.f32.partialorder %v725, %v733
      %v735 = vsel %vm734, %v730, 20
      %v736 = vsel %vm128, %v735, 2147483647
      %v737 = vand.u32 %v736, 65535
      %v738 = vshra.s32 %v736, 16
      %v739 = vcvt.s32.f32 %v737
      %v740 = vcvt.s32.f32 %v738
      %741 = vmin.xlane.f32.xlu0 %v740
      %v742 = vpop.xlane.xlu0 %741
      %vm743 = vcmp.eq.f32.partialorder %v740, %v742
      %v744 = vsel %vm743, %v739, inf
      %745 = vmin.xlane.f32.xlu0 %v744
      %v746 = vpop.xlane.xlu0 %745
      %v747 = vcvt.f32.s32 %v746
      %v748 = vcvt.f32.s32 %v742
      %v749 = vshll.u32 %v748, 16
      %v750 = vadd.s32 %v749, %v747
      %vm751 = vcmp.eq.s32.totalorder %v730, %v750
      %v752 = vsel %vm751, 1, 0
      %v753 = vcvt.s32.f32 %v752
      %v754 = vpack.c.bf16 %v753, %v753
      %v758 = vunpack.c.l.b16 %v90
      %v759 = vunpack.c.l.b16 %v91
      %v760 = vunpack.c.l.b16 %v92
      %v761 = vpack.c.b16 %v759, %v758
      %v762 = vpack.c.b16 %v760, %v760
      %vm764 = vcmask 162816
      %v766 = vsel %vm764, %v754, 0
      %v769 = vsel %vm247, %v762, 0
      %771 = vmatprep.subr.bf16.mxu0 0
      %772 = vmatpush1.bf16.msra.mxu0 0
      %773 = vmatprep.subr.bf16.mxu0 0
      %774 = vmatpush1.bf16.msra.mxu0 0
      %775 = vmatprep.subr.bf16.mxu0 0
      %776 = vmatpush1.bf16.msra.mxu0 0
      %777 = vmatprep.subr.bf16.mxu0 0
      %778 = vmatpush1.bf16.msra.mxu0 0
      %779 = vmatprep.subr.bf16.mxu0 0
      %780 = vmatpush1.bf16.msra.mxu0 0
      %781 = vmatprep.subr.bf16.mxu0 0
      %782 = vmatpush1.bf16.msra.mxu0 0
      %783 = vmatprep.subr.bf16.mxu0 0
      %784 = vmatpush1.bf16.msra.mxu0 %v769
      %785 = vmatprep.subr.bf16.mxu0 0
      %786 = vmatpush1.bf16.msra.mxu0 %v761
      %787 = vmatprep.subr.bf16.mxu0 0
      %788 = vmatpush2.bf16.msra.mxu0 0
      %789 = vmatprep.subr.bf16.mxu0 0
      %790 = vmatpush2.bf16.msra.mxu0 0
      %791 = vmatprep.subr.bf16.mxu0 0
      %792 = vmatpush2.bf16.msra.mxu0 0
      %793 = vmatprep.subr.bf16.mxu0 0
      %794 = vmatpush2.bf16.msra.mxu0 0
      %795 = vmatprep.subr.bf16.mxu0 0
      %796 = vmatpush2.bf16.msra.mxu0 0
      %797 = vmatprep.subr.bf16.mxu0 0
      %798 = vmatpush2.bf16.msra.mxu0 0
      %799 = vmatprep.subr.bf16.mxu0 0
      %800 = vmatpush2.bf16.msra.mxu0 0
      %801 = vmatprep.subr.bf16.mxu0 0
      %802 = vmatpush2.bf16.msra.mxu0 0
      %803 = vmatprep.mubr.bf16.mxu0 0
      %804 = vmatmul.mubr.bf16.gmra.mxu0 %v766
      %v805 = vpop.f32.mrf.mxu0
      %v806 = vadd.f32 0.0, %v805
      %v807 = vpop.f32.mrf.mxu0
      %v808 = vpop.f32.mrf.mxu0
      %v809 = vpop.f32.mrf.mxu0
      %810 = vdwg.mxu0
      %s811 = scalar_lea.vmem %s1, %s726
      %v812 = vld [vmem:[%s811] sm:$0x3]
      %s813 = sld [smem:[#allocation2 + %s133]]
      %p814 = scmp.eq.s32.totalorder %s813, 1
      %s815 = scalar_select %p814, 1, 0
      %v816 = vstv %s815
      %vm817 = vcmp.eq.s32.totalorder %v816, 1
      %v818 = vsel %vm817, %v812, %v806
      %820 = vrot.lane.b32.xlu0 %v542, 96
      %v821 = vpop.permute.xlu0 %820
    $region78: #{_forward.3} parent=1 // loop_footer
      %s137 = sadd.s32 1, %s133
    $region79: #{_forward.3} parent=1 // loop_footer_branch
      %132 = sbr.rel target = $region75
    $region80: #{_forward.3} parent=1 // loop_exit
      _
    // Predicated region
    $region81: #{_forward.3} parent=1 // pred_check
      _
    $region82: #{_forward.3} parent=1 // pred_check_branch
      %824 = sbr.rel (0) target = $region84
    $region83: #{_forward.3} parent=1 // pred_region
      %s826 = ssub.s32 256, 256
      %827 = vsyncadd [#allocation3], %s826
      %s828 = sshll.u32 [#allocation5], 4
      %s829 = int_to_ptr.vmem [resolvable:$true] %s828
      %834 = dma.vmem_to_hbm [thread:$0]  %s829, 256, %s17, [#allocation3], 32, 32, 2
    $region84: #{_forward.3} parent=1 // pred_fallthru
      _
    // Predicated region
    $region85: #{_forward.3} parent=1 // pred_check
      _
    $region86: #{_forward.3} parent=1 // pred_check_branch
      %836 = sbr.rel (0) target = $region88
    $region87: #{_forward.3} parent=1 // pred_region
      %837 = dma.done [#allocation3], 256
    $region88: #{_forward.3} parent=1 // pred_fallthru
      _
    %838 = vsyncpa [#allocation3], 1
    %839 = vsyncpa [#allocation4], 1

</llo_original>
